<compile_context>
chip_gen: v7x
topology: tpu7x:2x2x1
jax: 0.10.0
libtpu: 0.0.40
codegen_flags: <defaults>
</compile_context>

<pallas_src>
from functools import partial

import jax
import jax.numpy as jnp
import numpy as np
from jax import lax
from jax.experimental import pallas as pl
from jax.experimental.pallas import tpu as pltpu


def _round_up(x, m):
    return ((x + m - 1) // m) * m


def _quant_params(num_bits, saturation_val):
    # symmetric_linear_quantization_params with a scalar saturation value.
    n = 2 ** (num_bits - 1) - 1
    sat = float(saturation_val)
    if sat < 0:
        raise ValueError("Saturation value must be >= 0")
    if sat == 0.0:
        sat = float(n)
    return float(n) / sat, 0.0


def _vmem_plan():
    """(vmem_limit_bytes, per-step working-set budget) sized per TPU generation."""
    try:
        cap = pltpu.get_tpu_info().vmem_capacity_bytes
    except Exception:  # hardware query only; fall back to the smallest (v7x) VMEM
        cap = 64 * 1024 * 1024
    limit = min((cap * 3) // 4, 96 * 1024 * 1024)   # 48 MiB on 64 MiB parts, 96 MiB on 128 MiB parts
    limit = max(limit, 32 * 1024 * 1024)
    budget = (limit * 2) // 3                       # leave headroom for double-buffering slack
    return int(limit), int(budget)


def _pick_tb(N, C, L, OC, Mpad, budget_bytes):
    """Batch-tile size: fill the VMEM budget but keep >= 2 grid steps for megacore."""
    per_batch = 4 * (2 * C * L          # double-buffered input block
                     + 2 * OC * Mpad    # double-buffered output block
                     + 2 * OC * Mpad)   # live accumulators (out, y) inside the kernel
    tb = max(1, budget_bytes // max(per_batch, 1))
    tb = min(tb, N)
    if N >= 2:
        tb = min(tb, -(-N // 2))        # >= 2 grid steps when there are >= 2 batch elements
    return int(max(1, tb))


def _make_kernel(TB, C, OC, KH, KW, Wp, Mpad, stride, scale, inv_scale):
    def kernel(x_ref, w_ref, b_ref, o_ref):
        # x_ref: (TB, C, L) flattened, padded inputs for this batch tile
        # w_ref: (C, OC, K2) resident weights; b_ref: (C, OC, 1) resident biases
        # o_ref: (TB, OC, Mpad) lane-dense output block
        out = jnp.zeros((TB, OC, Mpad), jnp.float32)

        # Input-channel reduction runs inside one invocation; C is small & static -> unrolled.
        for c in range(C):
            if stride != 1:
                xc = x_ref[:, c, :]                                  # (TB, L)
            y = jnp.zeros((TB, OC, Mpad), jnp.float32)
            for kh in range(KH):
                for kw in range(KW):
                    k = kh * KW + kw
                    off = kh * Wp + kw
                    if stride == 1:
                        col = x_ref[:, c, off:off + Mpad]            # (TB, Mpad), contiguous tap
                    else:
                        col = lax.slice(xc, (0, off),
                                        (TB, off + stride * (Mpad - 1) + 1),
                                        (1, stride))                 # (TB, Mpad)
                    wk = w_ref[c, :, k:k + 1]                        # (OC, 1)
                    # Same FMA order as the reference (per-tap multiply-accumulate).
                    y = y + wk[None, :, :] * col[:, None, :]         # (TB, OC, Mpad)
            y = y + b_ref[c][None, :, :]                             # bias, broadcast over Mpad

            # LinearQuantizeSTE forward (symmetric, zero_point == 0, no clamp in the module):
            # quantize + dequantize this channel's conv result, then sum over input channels.
            out = out + jnp.round(scale * y) * inv_scale

        o_ref[...] = out

    return kernel


@partial(jax.jit, static_argnames=("stride", "padding", "outbits", "outmax"))
def demolition_conv2d(x, weights, biases, *, stride=1, padding=0, outbits=5, outmax=1.2):
    """x: (N, C, H, W) f32.  weights: (C, OC, 1, KH, KW).  biases: (C, OC)."""
    N, C, H, W = x.shape
    Cw, OC, one, KH, KW = weights.shape
    assert Cw == C and one == 1
    K2 = KH * KW
    Ho = (H + 2 * padding - KH) // stride + 1
    Wo = (W + 2 * padding - KW) // stride + 1
    Hp, Wp = H + 2 * padding, W + 2 * padding
    Mp = Ho * Wp                                   # flattened output positions (incl. junk cols)
    Mpad = _round_up(Mp, 128)                      # lane-dense output minor dim
    scale, _zero_point = _quant_params(outbits, outmax)
    inv_scale = 1.0 / scale

    # Wrapper-side layout plumbing: pad spatially, flatten (Hp, Wp), and pad the flat axis so
    # every im2col tap slice (offset kh*Wp + kw, length stride*(Mpad-1)+1) stays in bounds.
    xp = jnp.pad(x.astype(jnp.float32),
                 ((0, 0), (0, 0), (padding, padding), (padding, padding)))
    off_max = (KH - 1) * Wp + (KW - 1)
    L = _round_up(max(off_max + stride * (Mpad - 1) + 1, Hp * Wp), 128)
    x_flat = xp.reshape(N, C, Hp * Wp)
    x_flat = jnp.pad(x_flat, ((0, 0), (0, 0), (0, L - Hp * Wp)))

    # Per-generation VMEM plan -> batch-tile size, grid = Npad // TB batch tiles.
    vmem_limit, budget = _vmem_plan()
    TB = _pick_tb(N, C, L, OC, Mpad, budget)
    Npad = _round_up(N, TB)
    if Npad != N:
        x_flat = jnp.pad(x_flat, ((0, Npad - N), (0, 0), (0, 0)))

    w_mat = weights[:, :, 0, :, :].reshape(C, OC, K2).astype(jnp.float32)   # (C, OC, K2)
    b_mat = biases.reshape(C, OC, 1).astype(jnp.float32)                    # (C, OC, 1)

    kernel = _make_kernel(TB, C, OC, KH, KW, Wp, Mpad, stride, scale, inv_scale)

    flops = 2 * N * C * OC * Ho * Wo * K2
    bytes_accessed = 4 * (Npad * C * L + C * OC * K2 + C * OC + Npad * OC * Mpad)

    out_flat = pl.pallas_call(
        kernel,
        out_shape=jax.ShapeDtypeStruct((Npad, OC, Mpad), jnp.float32),
        grid_spec=pltpu.PrefetchScalarGridSpec(
            num_scalar_prefetch=0,
            grid=(Npad // TB,),                                    # batch tiles only
            in_specs=[
                pl.BlockSpec((TB, C, L), lambda n: (n, 0, 0)),     # TB batch elements per step
                pl.BlockSpec((C, OC, K2), lambda n: (0, 0, 0)),    # resident weights
                pl.BlockSpec((C, OC, 1), lambda n: (0, 0, 0)),     # resident biases
            ],
            out_specs=pl.BlockSpec((TB, OC, Mpad), lambda n: (n, 0, 0)),
        ),
        compiler_params=pltpu.CompilerParams(
            dimension_semantics=("parallel",),
            vmem_limit_bytes=vmem_limit,
        ),
        cost_estimate=pl.CostEstimate(flops=flops, transcendentals=0,
                                      bytes_accessed=bytes_accessed),
    )(x_flat, w_mat, b_mat)

    # TODO(synk): downstream consumers could take the (Ho, Wp)-padded layout and skip this trim.
    return out_flat[:N, :, :Mp].reshape(N, OC, Ho, Wp)[:, :, :, :Wo]


def reference(x, weights, biases, *, stride, padding, outbits=5, outmax=1.2):
    """Plain-JAX reference mirroring the PyTorch forward (same accumulation order)."""
    N, C, H, W = x.shape
    _, OC, _, KH, KW = weights.shape
    Ho = (H + 2 * padding - KH) // stride + 1
    Wo = (W + 2 * padding - KW) // stride + 1
    scale, zero_point = _quant_params(outbits, outmax)
    xp = jnp.pad(x, ((0, 0), (0, 0), (padding, padding), (padding, padding)))
    out = jnp.zeros((N, OC, Ho, Wo), jnp.float32)
    for c in range(C):
        y = jnp.zeros((N, OC, Ho, Wo), jnp.float32)
        for kh in range(KH):
            for kw in range(KW):
                patch = xp[:, c, kh:kh + stride * (Ho - 1) + 1:stride,
                               kw:kw + stride * (Wo - 1) + 1:stride]
                y = y + patch[:, None] * weights[c, :, 0, kh, kw][None, :, None, None]
        y = y + biases[c][None, :, None, None]
        yq = jnp.round(scale * y - zero_point)
        out = out + (yq + zero_point) / scale
    return out


if __name__ == "__main__":
    # Small shapes consistent with the module: NCHW input, one Conv2d(1, OC, K) per channel.
    N, C, H, W = 2, 4, 16, 16
    OC, K = 8, 3
    stride, padding = 1, 1

    key = jax.random.PRNGKey(0)
    kx, kwt, kb = jax.random.split(key, 3)
    x = jax.random.normal(kx, (N, C, H, W), dtype=jnp.float32)
    weights = 0.1 * jax.random.normal(kwt, (C, OC, 1, K, K), dtype=jnp.float32)
    biases = 0.1 * jax.random.normal(kb, (C, OC), dtype=jnp.float32)

    out = demolition_conv2d(x, weights, biases, stride=stride, padding=padding,
                            outbits=5, outmax=1.2)
    out = np.asarray(jax.block_until_ready(out))

    ref = np.asarray(jax.block_until_ready(
        reference(x, weights, biases, stride=stride, padding=padding,
                  outbits=5, outmax=1.2)))

    np.testing.assert_allclose(out, ref, rtol=1e-5, atol=1e-5)
    print("KERNEL_OK")
</pallas_src>

<mosaic_0001>
module attributes {stable_mosaic.version = 11 : i64} {
  func.func @kernel(%arg0: i32, %arg1: memref<1x4x512xf32, #tpu.memory_space<vmem>>, %arg2: memref<4x8x9xf32, #tpu.memory_space<vmem>>, %arg3: memref<4x8x1xf32, #tpu.memory_space<vmem>>, %arg4: memref<1x8x384xf32, #tpu.memory_space<vmem>>) attributes {dimension_semantics = [#tpu.dimension_semantics<parallel>], iteration_bounds = array<i64: 2>, scalar_prefetch = 0 : i64, scratch_operands = 0 : i64, tpu.core_type = #tpu.core_type<tc>, window_params = [{transform_indices = @transform_0, window_bounds = array<i64: 1, 4, 512>}, {pipeline_mode = #tpu.pipeline_mode<synchronous>, transform_indices = @transform_1, window_bounds = array<i64: 4, 8, 9>}, {pipeline_mode = #tpu.pipeline_mode<synchronous>, transform_indices = @transform_2, window_bounds = array<i64: 4, 8, 1>}, {transform_indices = @transform_3, window_bounds = array<i64: 1, 8, 384>}]} {
    %cst = arith.constant 0.000000e+00 : f32
    %0 = vector.broadcast %cst : f32 to vector<1x8x384xf32>
    %cst_0 = arith.constant 0.000000e+00 : f32
    %1 = vector.broadcast %cst_0 : f32 to vector<1x8x384xf32>
    %c0 = arith.constant 0 : index
    %c0_1 = arith.constant 0 : index
    %c0_2 = arith.constant 0 : index
    %2 = vector.load %arg1[%c0, %c0_1, %c0_2] : memref<1x4x512xf32, #tpu.memory_space<vmem>>, vector<1x1x384xf32>
    %3 = vector.shape_cast %2 : vector<1x1x384xf32> to vector<1x384xf32>
    %c0_3 = arith.constant 0 : index
    %c0_4 = arith.constant 0 : index
    %c0_5 = arith.constant 0 : index
    %4 = vector.load %arg2[%c0_3, %c0_4, %c0_5] : memref<4x8x9xf32, #tpu.memory_space<vmem>>, vector<1x8x1xf32>
    %5 = vector.shape_cast %4 : vector<1x8x1xf32> to vector<8x1xf32>
    %6 = vector.shape_cast %5 : vector<8x1xf32> to vector<1x8x1xf32>
    %7 = vector.shape_cast %3 : vector<1x384xf32> to vector<1x1x384xf32>
    %8 = vector.broadcast %6 : vector<1x8x1xf32> to vector<1x8x384xf32>
    %9 = vector.broadcast %7 : vector<1x1x384xf32> to vector<1x8x384xf32>
    %10 = arith.mulf %8, %9 : vector<1x8x384xf32>
    %11 = arith.addf %1, %10 : vector<1x8x384xf32>
    %c0_6 = arith.constant 0 : index
    %c0_7 = arith.constant 0 : index
    %c1 = arith.constant 1 : index
    %12 = vector.load %arg1[%c0_6, %c0_7, %c1] : memref<1x4x512xf32, #tpu.memory_space<vmem>>, vector<1x1x384xf32>
    %13 = vector.shape_cast %12 : vector<1x1x384xf32> to vector<1x384xf32>
    %c0_8 = arith.constant 0 : index
    %c0_9 = arith.constant 0 : index
    %c1_10 = arith.constant 1 : index
    %14 = vector.load %arg2[%c0_8, %c0_9, %c1_10] : memref<4x8x9xf32, #tpu.memory_space<vmem>>, vector<1x8x1xf32>
    %15 = vector.shape_cast %14 : vector<1x8x1xf32> to vector<8x1xf32>
    %16 = vector.shape_cast %15 : vector<8x1xf32> to vector<1x8x1xf32>
    %17 = vector.shape_cast %13 : vector<1x384xf32> to vector<1x1x384xf32>
    %18 = vector.broadcast %16 : vector<1x8x1xf32> to vector<1x8x384xf32>
    %19 = vector.broadcast %17 : vector<1x1x384xf32> to vector<1x8x384xf32>
    %20 = arith.mulf %18, %19 : vector<1x8x384xf32>
    %21 = arith.addf %11, %20 : vector<1x8x384xf32>
    %c0_11 = arith.constant 0 : index
    %c0_12 = arith.constant 0 : index
    %c2 = arith.constant 2 : index
    %22 = vector.load %arg1[%c0_11, %c0_12, %c2] : memref<1x4x512xf32, #tpu.memory_space<vmem>>, vector<1x1x384xf32>
    %23 = vector.shape_cast %22 : vector<1x1x384xf32> to vector<1x384xf32>
    %c0_13 = arith.constant 0 : index
    %c0_14 = arith.constant 0 : index
    %c2_15 = arith.constant 2 : index
    %24 = vector.load %arg2[%c0_13, %c0_14, %c2_15] : memref<4x8x9xf32, #tpu.memory_space<vmem>>, vector<1x8x1xf32>
    %25 = vector.shape_cast %24 : vector<1x8x1xf32> to vector<8x1xf32>
    %26 = vector.shape_cast %25 : vector<8x1xf32> to vector<1x8x1xf32>
    %27 = vector.shape_cast %23 : vector<1x384xf32> to vector<1x1x384xf32>
    %28 = vector.broadcast %26 : vector<1x8x1xf32> to vector<1x8x384xf32>
    %29 = vector.broadcast %27 : vector<1x1x384xf32> to vector<1x8x384xf32>
    %30 = arith.mulf %28, %29 : vector<1x8x384xf32>
    %31 = arith.addf %21, %30 : vector<1x8x384xf32>
    %c0_16 = arith.constant 0 : index
    %c0_17 = arith.constant 0 : index
    %c18 = arith.constant 18 : index
    %32 = vector.load %arg1[%c0_16, %c0_17, %c18] : memref<1x4x512xf32, #tpu.memory_space<vmem>>, vector<1x1x384xf32>
    %33 = vector.shape_cast %32 : vector<1x1x384xf32> to vector<1x384xf32>
    %c0_18 = arith.constant 0 : index
    %c0_19 = arith.constant 0 : index
    %c3 = arith.constant 3 : index
    %34 = vector.load %arg2[%c0_18, %c0_19, %c3] : memref<4x8x9xf32, #tpu.memory_space<vmem>>, vector<1x8x1xf32>
    %35 = vector.shape_cast %34 : vector<1x8x1xf32> to vector<8x1xf32>
    %36 = vector.shape_cast %35 : vector<8x1xf32> to vector<1x8x1xf32>
    %37 = vector.shape_cast %33 : vector<1x384xf32> to vector<1x1x384xf32>
    %38 = vector.broadcast %36 : vector<1x8x1xf32> to vector<1x8x384xf32>
    %39 = vector.broadcast %37 : vector<1x1x384xf32> to vector<1x8x384xf32>
    %40 = arith.mulf %38, %39 : vector<1x8x384xf32>
    %41 = arith.addf %31, %40 : vector<1x8x384xf32>
    %c0_20 = arith.constant 0 : index
    %c0_21 = arith.constant 0 : index
    %c19 = arith.constant 19 : index
    %42 = vector.load %arg1[%c0_20, %c0_21, %c19] : memref<1x4x512xf32, #tpu.memory_space<vmem>>, vector<1x1x384xf32>
    %43 = vector.shape_cast %42 : vector<1x1x384xf32> to vector<1x384xf32>
    %c0_22 = arith.constant 0 : index
    %c0_23 = arith.constant 0 : index
    %c4 = arith.constant 4 : index
    %44 = vector.load %arg2[%c0_22, %c0_23, %c4] : memref<4x8x9xf32, #tpu.memory_space<vmem>>, vector<1x8x1xf32>
    %45 = vector.shape_cast %44 : vector<1x8x1xf32> to vector<8x1xf32>
    %46 = vector.shape_cast %45 : vector<8x1xf32> to vector<1x8x1xf32>
    %47 = vector.shape_cast %43 : vector<1x384xf32> to vector<1x1x384xf32>
    %48 = vector.broadcast %46 : vector<1x8x1xf32> to vector<1x8x384xf32>
    %49 = vector.broadcast %47 : vector<1x1x384xf32> to vector<1x8x384xf32>
    %50 = arith.mulf %48, %49 : vector<1x8x384xf32>
    %51 = arith.addf %41, %50 : vector<1x8x384xf32>
    %c0_24 = arith.constant 0 : index
    %c0_25 = arith.constant 0 : index
    %c20 = arith.constant 20 : index
    %52 = vector.load %arg1[%c0_24, %c0_25, %c20] : memref<1x4x512xf32, #tpu.memory_space<vmem>>, vector<1x1x384xf32>
    %53 = vector.shape_cast %52 : vector<1x1x384xf32> to vector<1x384xf32>
    %c0_26 = arith.constant 0 : index
    %c0_27 = arith.constant 0 : index
    %c5 = arith.constant 5 : index
    %54 = vector.load %arg2[%c0_26, %c0_27, %c5] : memref<4x8x9xf32, #tpu.memory_space<vmem>>, vector<1x8x1xf32>
    %55 = vector.shape_cast %54 : vector<1x8x1xf32> to vector<8x1xf32>
    %56 = vector.shape_cast %55 : vector<8x1xf32> to vector<1x8x1xf32>
    %57 = vector.shape_cast %53 : vector<1x384xf32> to vector<1x1x384xf32>
    %58 = vector.broadcast %56 : vector<1x8x1xf32> to vector<1x8x384xf32>
    %59 = vector.broadcast %57 : vector<1x1x384xf32> to vector<1x8x384xf32>
    %60 = arith.mulf %58, %59 : vector<1x8x384xf32>
    %61 = arith.addf %51, %60 : vector<1x8x384xf32>
    %c0_28 = arith.constant 0 : index
    %c0_29 = arith.constant 0 : index
    %c36 = arith.constant 36 : index
    %62 = vector.load %arg1[%c0_28, %c0_29, %c36] : memref<1x4x512xf32, #tpu.memory_space<vmem>>, vector<1x1x384xf32>
    %63 = vector.shape_cast %62 : vector<1x1x384xf32> to vector<1x384xf32>
    %c0_30 = arith.constant 0 : index
    %c0_31 = arith.constant 0 : index
    %c6 = arith.constant 6 : index
    %64 = vector.load %arg2[%c0_30, %c0_31, %c6] : memref<4x8x9xf32, #tpu.memory_space<vmem>>, vector<1x8x1xf32>
    %65 = vector.shape_cast %64 : vector<1x8x1xf32> to vector<8x1xf32>
    %66 = vector.shape_cast %65 : vector<8x1xf32> to vector<1x8x1xf32>
    %67 = vector.shape_cast %63 : vector<1x384xf32> to vector<1x1x384xf32>
    %68 = vector.broadcast %66 : vector<1x8x1xf32> to vector<1x8x384xf32>
    %69 = vector.broadcast %67 : vector<1x1x384xf32> to vector<1x8x384xf32>
    %70 = arith.mulf %68, %69 : vector<1x8x384xf32>
    %71 = arith.addf %61, %70 : vector<1x8x384xf32>
    %c0_32 = arith.constant 0 : index
    %c0_33 = arith.constant 0 : index
    %c37 = arith.constant 37 : index
    %72 = vector.load %arg1[%c0_32, %c0_33, %c37] : memref<1x4x512xf32, #tpu.memory_space<vmem>>, vector<1x1x384xf32>
    %73 = vector.shape_cast %72 : vector<1x1x384xf32> to vector<1x384xf32>
    %c0_34 = arith.constant 0 : index
    %c0_35 = arith.constant 0 : index
    %c7 = arith.constant 7 : index
    %74 = vector.load %arg2[%c0_34, %c0_35, %c7] : memref<4x8x9xf32, #tpu.memory_space<vmem>>, vector<1x8x1xf32>
    %75 = vector.shape_cast %74 : vector<1x8x1xf32> to vector<8x1xf32>
    %76 = vector.shape_cast %75 : vector<8x1xf32> to vector<1x8x1xf32>
    %77 = vector.shape_cast %73 : vector<1x384xf32> to vector<1x1x384xf32>
    %78 = vector.broadcast %76 : vector<1x8x1xf32> to vector<1x8x384xf32>
    %79 = vector.broadcast %77 : vector<1x1x384xf32> to vector<1x8x384xf32>
    %80 = arith.mulf %78, %79 : vector<1x8x384xf32>
    %81 = arith.addf %71, %80 : vector<1x8x384xf32>
    %c0_36 = arith.constant 0 : index
    %c0_37 = arith.constant 0 : index
    %c38 = arith.constant 38 : index
    %82 = vector.load %arg1[%c0_36, %c0_37, %c38] : memref<1x4x512xf32, #tpu.memory_space<vmem>>, vector<1x1x384xf32>
    %83 = vector.shape_cast %82 : vector<1x1x384xf32> to vector<1x384xf32>
    %c0_38 = arith.constant 0 : index
    %c0_39 = arith.constant 0 : index
    %c8 = arith.constant 8 : index
    %84 = vector.load %arg2[%c0_38, %c0_39, %c8] : memref<4x8x9xf32, #tpu.memory_space<vmem>>, vector<1x8x1xf32>
    %85 = vector.shape_cast %84 : vector<1x8x1xf32> to vector<8x1xf32>
    %86 = vector.shape_cast %85 : vector<8x1xf32> to vector<1x8x1xf32>
    %87 = vector.shape_cast %83 : vector<1x384xf32> to vector<1x1x384xf32>
    %88 = vector.broadcast %86 : vector<1x8x1xf32> to vector<1x8x384xf32>
    %89 = vector.broadcast %87 : vector<1x1x384xf32> to vector<1x8x384xf32>
    %90 = arith.mulf %88, %89 : vector<1x8x384xf32>
    %91 = arith.addf %81, %90 : vector<1x8x384xf32>
    %c0_40 = arith.constant 0 : index
    %c0_41 = arith.constant 0 : index
    %c0_42 = arith.constant 0 : index
    %92 = vector.load %arg3[%c0_40, %c0_41, %c0_42] : memref<4x8x1xf32, #tpu.memory_space<vmem>>, vector<1x8x1xf32>
    %93 = vector.shape_cast %92 : vector<1x8x1xf32> to vector<8x1xf32>
    %94 = vector.shape_cast %93 : vector<8x1xf32> to vector<1x8x1xf32>
    %95 = vector.broadcast %94 : vector<1x8x1xf32> to vector<1x8x384xf32>
    %96 = arith.addf %91, %95 : vector<1x8x384xf32>
    %cst_43 = arith.constant 1.250000e+01 : f32
    %97 = vector.broadcast %cst_43 : f32 to vector<1x8x384xf32>
    %98 = arith.mulf %97, %96 : vector<1x8x384xf32>
    %99 = math.roundeven %98 : vector<1x8x384xf32>
    %cst_44 = arith.constant 8.000000e-02 : f32
    %100 = vector.broadcast %cst_44 : f32 to vector<1x8x384xf32>
    %101 = arith.mulf %99, %100 : vector<1x8x384xf32>
    %102 = arith.addf %0, %101 : vector<1x8x384xf32>
    %cst_45 = arith.constant 0.000000e+00 : f32
    %103 = vector.broadcast %cst_45 : f32 to vector<1x8x384xf32>
    %c0_46 = arith.constant 0 : index
    %c1_47 = arith.constant 1 : index
    %c0_48 = arith.constant 0 : index
    %104 = vector.load %arg1[%c0_46, %c1_47, %c0_48] : memref<1x4x512xf32, #tpu.memory_space<vmem>>, vector<1x1x384xf32>
    %105 = vector.shape_cast %104 : vector<1x1x384xf32> to vector<1x384xf32>
    %c1_49 = arith.constant 1 : index
    %c0_50 = arith.constant 0 : index
    %c0_51 = arith.constant 0 : index
    %106 = vector.load %arg2[%c1_49, %c0_50, %c0_51] : memref<4x8x9xf32, #tpu.memory_space<vmem>>, vector<1x8x1xf32>
    %107 = vector.shape_cast %106 : vector<1x8x1xf32> to vector<8x1xf32>
    %108 = vector.shape_cast %107 : vector<8x1xf32> to vector<1x8x1xf32>
    %109 = vector.shape_cast %105 : vector<1x384xf32> to vector<1x1x384xf32>
    %110 = vector.broadcast %108 : vector<1x8x1xf32> to vector<1x8x384xf32>
    %111 = vector.broadcast %109 : vector<1x1x384xf32> to vector<1x8x384xf32>
    %112 = arith.mulf %110, %111 : vector<1x8x384xf32>
    %113 = arith.addf %103, %112 : vector<1x8x384xf32>
    %c0_52 = arith.constant 0 : index
    %c1_53 = arith.constant 1 : index
    %c1_54 = arith.constant 1 : index
    %114 = vector.load %arg1[%c0_52, %c1_53, %c1_54] : memref<1x4x512xf32, #tpu.memory_space<vmem>>, vector<1x1x384xf32>
    %115 = vector.shape_cast %114 : vector<1x1x384xf32> to vector<1x384xf32>
    %c1_55 = arith.constant 1 : index
    %c0_56 = arith.constant 0 : index
    %c1_57 = arith.constant 1 : index
    %116 = vector.load %arg2[%c1_55, %c0_56, %c1_57] : memref<4x8x9xf32, #tpu.memory_space<vmem>>, vector<1x8x1xf32>
    %117 = vector.shape_cast %116 : vector<1x8x1xf32> to vector<8x1xf32>
    %118 = vector.shape_cast %117 : vector<8x1xf32> to vector<1x8x1xf32>
    %119 = vector.shape_cast %115 : vector<1x384xf32> to vector<1x1x384xf32>
    %120 = vector.broadcast %118 : vector<1x8x1xf32> to vector<1x8x384xf32>
    %121 = vector.broadcast %119 : vector<1x1x384xf32> to vector<1x8x384xf32>
    %122 = arith.mulf %120, %121 : vector<1x8x384xf32>
    %123 = arith.addf %113, %122 : vector<1x8x384xf32>
    %c0_58 = arith.constant 0 : index
    %c1_59 = arith.constant 1 : index
    %c2_60 = arith.constant 2 : index
    %124 = vector.load %arg1[%c0_58, %c1_59, %c2_60] : memref<1x4x512xf32, #tpu.memory_space<vmem>>, vector<1x1x384xf32>
    %125 = vector.shape_cast %124 : vector<1x1x384xf32> to vector<1x384xf32>
    %c1_61 = arith.constant 1 : index
    %c0_62 = arith.constant 0 : index
    %c2_63 = arith.constant 2 : index
    %126 = vector.load %arg2[%c1_61, %c0_62, %c2_63] : memref<4x8x9xf32, #tpu.memory_space<vmem>>, vector<1x8x1xf32>
    %127 = vector.shape_cast %126 : vector<1x8x1xf32> to vector<8x1xf32>
    %128 = vector.shape_cast %127 : vector<8x1xf32> to vector<1x8x1xf32>
    %129 = vector.shape_cast %125 : vector<1x384xf32> to vector<1x1x384xf32>
    %130 = vector.broadcast %128 : vector<1x8x1xf32> to vector<1x8x384xf32>
    %131 = vector.broadcast %129 : vector<1x1x384xf32> to vector<1x8x384xf32>
    %132 = arith.mulf %130, %131 : vector<1x8x384xf32>
    %133 = arith.addf %123, %132 : vector<1x8x384xf32>
    %c0_64 = arith.constant 0 : index
    %c1_65 = arith.constant 1 : index
    %c18_66 = arith.constant 18 : index
    %134 = vector.load %arg1[%c0_64, %c1_65, %c18_66] : memref<1x4x512xf32, #tpu.memory_space<vmem>>, vector<1x1x384xf32>
    %135 = vector.shape_cast %134 : vector<1x1x384xf32> to vector<1x384xf32>
    %c1_67 = arith.constant 1 : index
    %c0_68 = arith.constant 0 : index
    %c3_69 = arith.constant 3 : index
    %136 = vector.load %arg2[%c1_67, %c0_68, %c3_69] : memref<4x8x9xf32, #tpu.memory_space<vmem>>, vector<1x8x1xf32>
    %137 = vector.shape_cast %136 : vector<1x8x1xf32> to vector<8x1xf32>
    %138 = vector.shape_cast %137 : vector<8x1xf32> to vector<1x8x1xf32>
    %139 = vector.shape_cast %135 : vector<1x384xf32> to vector<1x1x384xf32>
    %140 = vector.broadcast %138 : vector<1x8x1xf32> to vector<1x8x384xf32>
    %141 = vector.broadcast %139 : vector<1x1x384xf32> to vector<1x8x384xf32>
    %142 = arith.mulf %140, %141 : vector<1x8x384xf32>
    %143 = arith.addf %133, %142 : vector<1x8x384xf32>
    %c0_70 = arith.constant 0 : index
    %c1_71 = arith.constant 1 : index
    %c19_72 = arith.constant 19 : index
    %144 = vector.load %arg1[%c0_70, %c1_71, %c19_72] : memref<1x4x512xf32, #tpu.memory_space<vmem>>, vector<1x1x384xf32>
    %145 = vector.shape_cast %144 : vector<1x1x384xf32> to vector<1x384xf32>
    %c1_73 = arith.constant 1 : index
    %c0_74 = arith.constant 0 : index
    %c4_75 = arith.constant 4 : index
    %146 = vector.load %arg2[%c1_73, %c0_74, %c4_75] : memref<4x8x9xf32, #tpu.memory_space<vmem>>, vector<1x8x1xf32>
    %147 = vector.shape_cast %146 : vector<1x8x1xf32> to vector<8x1xf32>
    %148 = vector.shape_cast %147 : vector<8x1xf32> to vector<1x8x1xf32>
    %149 = vector.shape_cast %145 : vector<1x384xf32> to vector<1x1x384xf32>
    %150 = vector.broadcast %148 : vector<1x8x1xf32> to vector<1x8x384xf32>
    %151 = vector.broadcast %149 : vector<1x1x384xf32> to vector<1x8x384xf32>
    %152 = arith.mulf %150, %151 : vector<1x8x384xf32>
    %153 = arith.addf %143, %152 : vector<1x8x384xf32>
    %c0_76 = arith.constant 0 : index
    %c1_77 = arith.constant 1 : index
    %c20_78 = arith.constant 20 : index
    %154 = vector.load %arg1[%c0_76, %c1_77, %c20_78] : memref<1x4x512xf32, #tpu.memory_space<vmem>>, vector<1x1x384xf32>
    %155 = vector.shape_cast %154 : vector<1x1x384xf32> to vector<1x384xf32>
    %c1_79 = arith.constant 1 : index
    %c0_80 = arith.constant 0 : index
    %c5_81 = arith.constant 5 : index
    %156 = vector.load %arg2[%c1_79, %c0_80, %c5_81] : memref<4x8x9xf32, #tpu.memory_space<vmem>>, vector<1x8x1xf32>
    %157 = vector.shape_cast %156 : vector<1x8x1xf32> to vector<8x1xf32>
    %158 = vector.shape_cast %157 : vector<8x1xf32> to vector<1x8x1xf32>
    %159 = vector.shape_cast %155 : vector<1x384xf32> to vector<1x1x384xf32>
    %160 = vector.broadcast %158 : vector<1x8x1xf32> to vector<1x8x384xf32>
    %161 = vector.broadcast %159 : vector<1x1x384xf32> to vector<1x8x384xf32>
    %162 = arith.mulf %160, %161 : vector<1x8x384xf32>
    %163 = arith.addf %153, %162 : vector<1x8x384xf32>
    %c0_82 = arith.constant 0 : index
    %c1_83 = arith.constant 1 : index
    %c36_84 = arith.constant 36 : index
    %164 = vector.load %arg1[%c0_82, %c1_83, %c36_84] : memref<1x4x512xf32, #tpu.memory_space<vmem>>, vector<1x1x384xf32>
    %165 = vector.shape_cast %164 : vector<1x1x384xf32> to vector<1x384xf32>
    %c1_85 = arith.constant 1 : index
    %c0_86 = arith.constant 0 : index
    %c6_87 = arith.constant 6 : index
    %166 = vector.load %arg2[%c1_85, %c0_86, %c6_87] : memref<4x8x9xf32, #tpu.memory_space<vmem>>, vector<1x8x1xf32>
    %167 = vector.shape_cast %166 : vector<1x8x1xf32> to vector<8x1xf32>
    %168 = vector.shape_cast %167 : vector<8x1xf32> to vector<1x8x1xf32>
    %169 = vector.shape_cast %165 : vector<1x384xf32> to vector<1x1x384xf32>
    %170 = vector.broadcast %168 : vector<1x8x1xf32> to vector<1x8x384xf32>
    %171 = vector.broadcast %169 : vector<1x1x384xf32> to vector<1x8x384xf32>
    %172 = arith.mulf %170, %171 : vector<1x8x384xf32>
    %173 = arith.addf %163, %172 : vector<1x8x384xf32>
    %c0_88 = arith.constant 0 : index
    %c1_89 = arith.constant 1 : index
    %c37_90 = arith.constant 37 : index
    %174 = vector.load %arg1[%c0_88, %c1_89, %c37_90] : memref<1x4x512xf32, #tpu.memory_space<vmem>>, vector<1x1x384xf32>
    %175 = vector.shape_cast %174 : vector<1x1x384xf32> to vector<1x384xf32>
    %c1_91 = arith.constant 1 : index
    %c0_92 = arith.constant 0 : index
    %c7_93 = arith.constant 7 : index
    %176 = vector.load %arg2[%c1_91, %c0_92, %c7_93] : memref<4x8x9xf32, #tpu.memory_space<vmem>>, vector<1x8x1xf32>
    %177 = vector.shape_cast %176 : vector<1x8x1xf32> to vector<8x1xf32>
    %178 = vector.shape_cast %177 : vector<8x1xf32> to vector<1x8x1xf32>
    %179 = vector.shape_cast %175 : vector<1x384xf32> to vector<1x1x384xf32>
    %180 = vector.broadcast %178 : vector<1x8x1xf32> to vector<1x8x384xf32>
    %181 = vector.broadcast %179 : vector<1x1x384xf32> to vector<1x8x384xf32>
    %182 = arith.mulf %180, %181 : vector<1x8x384xf32>
    %183 = arith.addf %173, %182 : vector<1x8x384xf32>
    %c0_94 = arith.constant 0 : index
    %c1_95 = arith.constant 1 : index
    %c38_96 = arith.constant 38 : index
    %184 = vector.load %arg1[%c0_94, %c1_95, %c38_96] : memref<1x4x512xf32, #tpu.memory_space<vmem>>, vector<1x1x384xf32>
    %185 = vector.shape_cast %184 : vector<1x1x384xf32> to vector<1x384xf32>
    %c1_97 = arith.constant 1 : index
    %c0_98 = arith.constant 0 : index
    %c8_99 = arith.constant 8 : index
    %186 = vector.load %arg2[%c1_97, %c0_98, %c8_99] : memref<4x8x9xf32, #tpu.memory_space<vmem>>, vector<1x8x1xf32>
    %187 = vector.shape_cast %186 : vector<1x8x1xf32> to vector<8x1xf32>
    %188 = vector.shape_cast %187 : vector<8x1xf32> to vector<1x8x1xf32>
    %189 = vector.shape_cast %185 : vector<1x384xf32> to vector<1x1x384xf32>
    %190 = vector.broadcast %188 : vector<1x8x1xf32> to vector<1x8x384xf32>
    %191 = vector.broadcast %189 : vector<1x1x384xf32> to vector<1x8x384xf32>
    %192 = arith.mulf %190, %191 : vector<1x8x384xf32>
    %193 = arith.addf %183, %192 : vector<1x8x384xf32>
    %c1_100 = arith.constant 1 : index
    %c0_101 = arith.constant 0 : index
    %c0_102 = arith.constant 0 : index
    %194 = vector.load %arg3[%c1_100, %c0_101, %c0_102] : memref<4x8x1xf32, #tpu.memory_space<vmem>>, vector<1x8x1xf32>
    %195 = vector.shape_cast %194 : vector<1x8x1xf32> to vector<8x1xf32>
    %196 = vector.shape_cast %195 : vector<8x1xf32> to vector<1x8x1xf32>
    %197 = vector.broadcast %196 : vector<1x8x1xf32> to vector<1x8x384xf32>
    %198 = arith.addf %193, %197 : vector<1x8x384xf32>
    %cst_103 = arith.constant 1.250000e+01 : f32
    %199 = vector.broadcast %cst_103 : f32 to vector<1x8x384xf32>
    %200 = arith.mulf %199, %198 : vector<1x8x384xf32>
    %201 = math.roundeven %200 : vector<1x8x384xf32>
    %cst_104 = arith.constant 8.000000e-02 : f32
    %202 = vector.broadcast %cst_104 : f32 to vector<1x8x384xf32>
    %203 = arith.mulf %201, %202 : vector<1x8x384xf32>
    %204 = arith.addf %102, %203 : vector<1x8x384xf32>
    %cst_105 = arith.constant 0.000000e+00 : f32
    %205 = vector.broadcast %cst_105 : f32 to vector<1x8x384xf32>
    %c0_106 = arith.constant 0 : index
    %c2_107 = arith.constant 2 : index
    %c0_108 = arith.constant 0 : index
    %206 = vector.load %arg1[%c0_106, %c2_107, %c0_108] : memref<1x4x512xf32, #tpu.memory_space<vmem>>, vector<1x1x384xf32>
    %207 = vector.shape_cast %206 : vector<1x1x384xf32> to vector<1x384xf32>
    %c2_109 = arith.constant 2 : index
    %c0_110 = arith.constant 0 : index
    %c0_111 = arith.constant 0 : index
    %208 = vector.load %arg2[%c2_109, %c0_110, %c0_111] : memref<4x8x9xf32, #tpu.memory_space<vmem>>, vector<1x8x1xf32>
    %209 = vector.shape_cast %208 : vector<1x8x1xf32> to vector<8x1xf32>
    %210 = vector.shape_cast %209 : vector<8x1xf32> to vector<1x8x1xf32>
    %211 = vector.shape_cast %207 : vector<1x384xf32> to vector<1x1x384xf32>
    %212 = vector.broadcast %210 : vector<1x8x1xf32> to vector<1x8x384xf32>
    %213 = vector.broadcast %211 : vector<1x1x384xf32> to vector<1x8x384xf32>
    %214 = arith.mulf %212, %213 : vector<1x8x384xf32>
    %215 = arith.addf %205, %214 : vector<1x8x384xf32>
    %c0_112 = arith.constant 0 : index
    %c2_113 = arith.constant 2 : index
    %c1_114 = arith.constant 1 : index
    %216 = vector.load %arg1[%c0_112, %c2_113, %c1_114] : memref<1x4x512xf32, #tpu.memory_space<vmem>>, vector<1x1x384xf32>
    %217 = vector.shape_cast %216 : vector<1x1x384xf32> to vector<1x384xf32>
    %c2_115 = arith.constant 2 : index
    %c0_116 = arith.constant 0 : index
    %c1_117 = arith.constant 1 : index
    %218 = vector.load %arg2[%c2_115, %c0_116, %c1_117] : memref<4x8x9xf32, #tpu.memory_space<vmem>>, vector<1x8x1xf32>
    %219 = vector.shape_cast %218 : vector<1x8x1xf32> to vector<8x1xf32>
    %220 = vector.shape_cast %219 : vector<8x1xf32> to vector<1x8x1xf32>
    %221 = vector.shape_cast %217 : vector<1x384xf32> to vector<1x1x384xf32>
    %222 = vector.broadcast %220 : vector<1x8x1xf32> to vector<1x8x384xf32>
    %223 = vector.broadcast %221 : vector<1x1x384xf32> to vector<1x8x384xf32>
    %224 = arith.mulf %222, %223 : vector<1x8x384xf32>
    %225 = arith.addf %215, %224 : vector<1x8x384xf32>
    %c0_118 = arith.constant 0 : index
    %c2_119 = arith.constant 2 : index
    %c2_120 = arith.constant 2 : index
    %226 = vector.load %arg1[%c0_118, %c2_119, %c2_120] : memref<1x4x512xf32, #tpu.memory_space<vmem>>, vector<1x1x384xf32>
    %227 = vector.shape_cast %226 : vector<1x1x384xf32> to vector<1x384xf32>
    %c2_121 = arith.constant 2 : index
    %c0_122 = arith.constant 0 : index
    %c2_123 = arith.constant 2 : index
    %228 = vector.load %arg2[%c2_121, %c0_122, %c2_123] : memref<4x8x9xf32, #tpu.memory_space<vmem>>, vector<1x8x1xf32>
    %229 = vector.shape_cast %228 : vector<1x8x1xf32> to vector<8x1xf32>
    %230 = vector.shape_cast %229 : vector<8x1xf32> to vector<1x8x1xf32>
    %231 = vector.shape_cast %227 : vector<1x384xf32> to vector<1x1x384xf32>
    %232 = vector.broadcast %230 : vector<1x8x1xf32> to vector<1x8x384xf32>
    %233 = vector.broadcast %231 : vector<1x1x384xf32> to vector<1x8x384xf32>
    %234 = arith.mulf %232, %233 : vector<1x8x384xf32>
    %235 = arith.addf %225, %234 : vector<1x8x384xf32>
    %c0_124 = arith.constant 0 : index
    %c2_125 = arith.constant 2 : index
    %c18_126 = arith.constant 18 : index
    %236 = vector.load %arg1[%c0_124, %c2_125, %c18_126] : memref<1x4x512xf32, #tpu.memory_space<vmem>>, vector<1x1x384xf32>
    %237 = vector.shape_cast %236 : vector<1x1x384xf32> to vector<1x384xf32>
    %c2_127 = arith.constant 2 : index
    %c0_128 = arith.constant 0 : index
    %c3_129 = arith.constant 3 : index
    %238 = vector.load %arg2[%c2_127, %c0_128, %c3_129] : memref<4x8x9xf32, #tpu.memory_space<vmem>>, vector<1x8x1xf32>
    %239 = vector.shape_cast %238 : vector<1x8x1xf32> to vector<8x1xf32>
    %240 = vector.shape_cast %239 : vector<8x1xf32> to vector<1x8x1xf32>
    %241 = vector.shape_cast %237 : vector<1x384xf32> to vector<1x1x384xf32>
    %242 = vector.broadcast %240 : vector<1x8x1xf32> to vector<1x8x384xf32>
    %243 = vector.broadcast %241 : vector<1x1x384xf32> to vector<1x8x384xf32>
    %244 = arith.mulf %242, %243 : vector<1x8x384xf32>
    %245 = arith.addf %235, %244 : vector<1x8x384xf32>
    %c0_130 = arith.constant 0 : index
    %c2_131 = arith.constant 2 : index
    %c19_132 = arith.constant 19 : index
    %246 = vector.load %arg1[%c0_130, %c2_131, %c19_132] : memref<1x4x512xf32, #tpu.memory_space<vmem>>, vector<1x1x384xf32>
    %247 = vector.shape_cast %246 : vector<1x1x384xf32> to vector<1x384xf32>
    %c2_133 = arith.constant 2 : index
    %c0_134 = arith.constant 0 : index
    %c4_135 = arith.constant 4 : index
    %248 = vector.load %arg2[%c2_133, %c0_134, %c4_135] : memref<4x8x9xf32, #tpu.memory_space<vmem>>, vector<1x8x1xf32>
    %249 = vector.shape_cast %248 : vector<1x8x1xf32> to vector<8x1xf32>
    %250 = vector.shape_cast %249 : vector<8x1xf32> to vector<1x8x1xf32>
    %251 = vector.shape_cast %247 : vector<1x384xf32> to vector<1x1x384xf32>
    %252 = vector.broadcast %250 : vector<1x8x1xf32> to vector<1x8x384xf32>
    %253 = vector.broadcast %251 : vector<1x1x384xf32> to vector<1x8x384xf32>
    %254 = arith.mulf %252, %253 : vector<1x8x384xf32>
    %255 = arith.addf %245, %254 : vector<1x8x384xf32>
    %c0_136 = arith.constant 0 : index
    %c2_137 = arith.constant 2 : index
    %c20_138 = arith.constant 20 : index
    %256 = vector.load %arg1[%c0_136, %c2_137, %c20_138] : memref<1x4x512xf32, #tpu.memory_space<vmem>>, vector<1x1x384xf32>
    %257 = vector.shape_cast %256 : vector<1x1x384xf32> to vector<1x384xf32>
    %c2_139 = arith.constant 2 : index
    %c0_140 = arith.constant 0 : index
    %c5_141 = arith.constant 5 : index
    %258 = vector.load %arg2[%c2_139, %c0_140, %c5_141] : memref<4x8x9xf32, #tpu.memory_space<vmem>>, vector<1x8x1xf32>
    %259 = vector.shape_cast %258 : vector<1x8x1xf32> to vector<8x1xf32>
    %260 = vector.shape_cast %259 : vector<8x1xf32> to vector<1x8x1xf32>
    %261 = vector.shape_cast %257 : vector<1x384xf32> to vector<1x1x384xf32>
    %262 = vector.broadcast %260 : vector<1x8x1xf32> to vector<1x8x384xf32>
    %263 = vector.broadcast %261 : vector<1x1x384xf32> to vector<1x8x384xf32>
    %264 = arith.mulf %262, %263 : vector<1x8x384xf32>
    %265 = arith.addf %255, %264 : vector<1x8x384xf32>
    %c0_142 = arith.constant 0 : index
    %c2_143 = arith.constant 2 : index
    %c36_144 = arith.constant 36 : index
    %266 = vector.load %arg1[%c0_142, %c2_143, %c36_144] : memref<1x4x512xf32, #tpu.memory_space<vmem>>, vector<1x1x384xf32>
    %267 = vector.shape_cast %266 : vector<1x1x384xf32> to vector<1x384xf32>
    %c2_145 = arith.constant 2 : index
    %c0_146 = arith.constant 0 : index
    %c6_147 = arith.constant 6 : index
    %268 = vector.load %arg2[%c2_145, %c0_146, %c6_147] : memref<4x8x9xf32, #tpu.memory_space<vmem>>, vector<1x8x1xf32>
    %269 = vector.shape_cast %268 : vector<1x8x1xf32> to vector<8x1xf32>
    %270 = vector.shape_cast %269 : vector<8x1xf32> to vector<1x8x1xf32>
    %271 = vector.shape_cast %267 : vector<1x384xf32> to vector<1x1x384xf32>
    %272 = vector.broadcast %270 : vector<1x8x1xf32> to vector<1x8x384xf32>
    %273 = vector.broadcast %271 : vector<1x1x384xf32> to vector<1x8x384xf32>
    %274 = arith.mulf %272, %273 : vector<1x8x384xf32>
    %275 = arith.addf %265, %274 : vector<1x8x384xf32>
    %c0_148 = arith.constant 0 : index
    %c2_149 = arith.constant 2 : index
    %c37_150 = arith.constant 37 : index
    %276 = vector.load %arg1[%c0_148, %c2_149, %c37_150] : memref<1x4x512xf32, #tpu.memory_space<vmem>>, vector<1x1x384xf32>
    %277 = vector.shape_cast %276 : vector<1x1x384xf32> to vector<1x384xf32>
    %c2_151 = arith.constant 2 : index
    %c0_152 = arith.constant 0 : index
    %c7_153 = arith.constant 7 : index
    %278 = vector.load %arg2[%c2_151, %c0_152, %c7_153] : memref<4x8x9xf32, #tpu.memory_space<vmem>>, vector<1x8x1xf32>
    %279 = vector.shape_cast %278 : vector<1x8x1xf32> to vector<8x1xf32>
    %280 = vector.shape_cast %279 : vector<8x1xf32> to vector<1x8x1xf32>
    %281 = vector.shape_cast %277 : vector<1x384xf32> to vector<1x1x384xf32>
    %282 = vector.broadcast %280 : vector<1x8x1xf32> to vector<1x8x384xf32>
    %283 = vector.broadcast %281 : vector<1x1x384xf32> to vector<1x8x384xf32>
    %284 = arith.mulf %282, %283 : vector<1x8x384xf32>
    %285 = arith.addf %275, %284 : vector<1x8x384xf32>
    %c0_154 = arith.constant 0 : index
    %c2_155 = arith.constant 2 : index
    %c38_156 = arith.constant 38 : index
    %286 = vector.load %arg1[%c0_154, %c2_155, %c38_156] : memref<1x4x512xf32, #tpu.memory_space<vmem>>, vector<1x1x384xf32>
    %287 = vector.shape_cast %286 : vector<1x1x384xf32> to vector<1x384xf32>
    %c2_157 = arith.constant 2 : index
    %c0_158 = arith.constant 0 : index
    %c8_159 = arith.constant 8 : index
    %288 = vector.load %arg2[%c2_157, %c0_158, %c8_159] : memref<4x8x9xf32, #tpu.memory_space<vmem>>, vector<1x8x1xf32>
    %289 = vector.shape_cast %288 : vector<1x8x1xf32> to vector<8x1xf32>
    %290 = vector.shape_cast %289 : vector<8x1xf32> to vector<1x8x1xf32>
    %291 = vector.shape_cast %287 : vector<1x384xf32> to vector<1x1x384xf32>
    %292 = vector.broadcast %290 : vector<1x8x1xf32> to vector<1x8x384xf32>
    %293 = vector.broadcast %291 : vector<1x1x384xf32> to vector<1x8x384xf32>
    %294 = arith.mulf %292, %293 : vector<1x8x384xf32>
    %295 = arith.addf %285, %294 : vector<1x8x384xf32>
    %c2_160 = arith.constant 2 : index
    %c0_161 = arith.constant 0 : index
    %c0_162 = arith.constant 0 : index
    %296 = vector.load %arg3[%c2_160, %c0_161, %c0_162] : memref<4x8x1xf32, #tpu.memory_space<vmem>>, vector<1x8x1xf32>
    %297 = vector.shape_cast %296 : vector<1x8x1xf32> to vector<8x1xf32>
    %298 = vector.shape_cast %297 : vector<8x1xf32> to vector<1x8x1xf32>
    %299 = vector.broadcast %298 : vector<1x8x1xf32> to vector<1x8x384xf32>
    %300 = arith.addf %295, %299 : vector<1x8x384xf32>
    %cst_163 = arith.constant 1.250000e+01 : f32
    %301 = vector.broadcast %cst_163 : f32 to vector<1x8x384xf32>
    %302 = arith.mulf %301, %300 : vector<1x8x384xf32>
    %303 = math.roundeven %302 : vector<1x8x384xf32>
    %cst_164 = arith.constant 8.000000e-02 : f32
    %304 = vector.broadcast %cst_164 : f32 to vector<1x8x384xf32>
    %305 = arith.mulf %303, %304 : vector<1x8x384xf32>
    %306 = arith.addf %204, %305 : vector<1x8x384xf32>
    %cst_165 = arith.constant 0.000000e+00 : f32
    %307 = vector.broadcast %cst_165 : f32 to vector<1x8x384xf32>
    %c0_166 = arith.constant 0 : index
    %c3_167 = arith.constant 3 : index
    %c0_168 = arith.constant 0 : index
    %308 = vector.load %arg1[%c0_166, %c3_167, %c0_168] : memref<1x4x512xf32, #tpu.memory_space<vmem>>, vector<1x1x384xf32>
    %309 = vector.shape_cast %308 : vector<1x1x384xf32> to vector<1x384xf32>
    %c3_169 = arith.constant 3 : index
    %c0_170 = arith.constant 0 : index
    %c0_171 = arith.constant 0 : index
    %310 = vector.load %arg2[%c3_169, %c0_170, %c0_171] : memref<4x8x9xf32, #tpu.memory_space<vmem>>, vector<1x8x1xf32>
    %311 = vector.shape_cast %310 : vector<1x8x1xf32> to vector<8x1xf32>
    %312 = vector.shape_cast %311 : vector<8x1xf32> to vector<1x8x1xf32>
    %313 = vector.shape_cast %309 : vector<1x384xf32> to vector<1x1x384xf32>
    %314 = vector.broadcast %312 : vector<1x8x1xf32> to vector<1x8x384xf32>
    %315 = vector.broadcast %313 : vector<1x1x384xf32> to vector<1x8x384xf32>
    %316 = arith.mulf %314, %315 : vector<1x8x384xf32>
    %317 = arith.addf %307, %316 : vector<1x8x384xf32>
    %c0_172 = arith.constant 0 : index
    %c3_173 = arith.constant 3 : index
    %c1_174 = arith.constant 1 : index
    %318 = vector.load %arg1[%c0_172, %c3_173, %c1_174] : memref<1x4x512xf32, #tpu.memory_space<vmem>>, vector<1x1x384xf32>
    %319 = vector.shape_cast %318 : vector<1x1x384xf32> to vector<1x384xf32>
    %c3_175 = arith.constant 3 : index
    %c0_176 = arith.constant 0 : index
    %c1_177 = arith.constant 1 : index
    %320 = vector.load %arg2[%c3_175, %c0_176, %c1_177] : memref<4x8x9xf32, #tpu.memory_space<vmem>>, vector<1x8x1xf32>
    %321 = vector.shape_cast %320 : vector<1x8x1xf32> to vector<8x1xf32>
    %322 = vector.shape_cast %321 : vector<8x1xf32> to vector<1x8x1xf32>
    %323 = vector.shape_cast %319 : vector<1x384xf32> to vector<1x1x384xf32>
    %324 = vector.broadcast %322 : vector<1x8x1xf32> to vector<1x8x384xf32>
    %325 = vector.broadcast %323 : vector<1x1x384xf32> to vector<1x8x384xf32>
    %326 = arith.mulf %324, %325 : vector<1x8x384xf32>
    %327 = arith.addf %317, %326 : vector<1x8x384xf32>
    %c0_178 = arith.constant 0 : index
    %c3_179 = arith.constant 3 : index
    %c2_180 = arith.constant 2 : index
    %328 = vector.load %arg1[%c0_178, %c3_179, %c2_180] : memref<1x4x512xf32, #tpu.memory_space<vmem>>, vector<1x1x384xf32>
    %329 = vector.shape_cast %328 : vector<1x1x384xf32> to vector<1x384xf32>
    %c3_181 = arith.constant 3 : index
    %c0_182 = arith.constant 0 : index
    %c2_183 = arith.constant 2 : index
    %330 = vector.load %arg2[%c3_181, %c0_182, %c2_183] : memref<4x8x9xf32, #tpu.memory_space<vmem>>, vector<1x8x1xf32>
    %331 = vector.shape_cast %330 : vector<1x8x1xf32> to vector<8x1xf32>
    %332 = vector.shape_cast %331 : vector<8x1xf32> to vector<1x8x1xf32>
    %333 = vector.shape_cast %329 : vector<1x384xf32> to vector<1x1x384xf32>
    %334 = vector.broadcast %332 : vector<1x8x1xf32> to vector<1x8x384xf32>
    %335 = vector.broadcast %333 : vector<1x1x384xf32> to vector<1x8x384xf32>
    %336 = arith.mulf %334, %335 : vector<1x8x384xf32>
    %337 = arith.addf %327, %336 : vector<1x8x384xf32>
    %c0_184 = arith.constant 0 : index
    %c3_185 = arith.constant 3 : index
    %c18_186 = arith.constant 18 : index
    %338 = vector.load %arg1[%c0_184, %c3_185, %c18_186] : memref<1x4x512xf32, #tpu.memory_space<vmem>>, vector<1x1x384xf32>
    %339 = vector.shape_cast %338 : vector<1x1x384xf32> to vector<1x384xf32>
    %c3_187 = arith.constant 3 : index
    %c0_188 = arith.constant 0 : index
    %c3_189 = arith.constant 3 : index
    %340 = vector.load %arg2[%c3_187, %c0_188, %c3_189] : memref<4x8x9xf32, #tpu.memory_space<vmem>>, vector<1x8x1xf32>
    %341 = vector.shape_cast %340 : vector<1x8x1xf32> to vector<8x1xf32>
    %342 = vector.shape_cast %341 : vector<8x1xf32> to vector<1x8x1xf32>
    %343 = vector.shape_cast %339 : vector<1x384xf32> to vector<1x1x384xf32>
    %344 = vector.broadcast %342 : vector<1x8x1xf32> to vector<1x8x384xf32>
    %345 = vector.broadcast %343 : vector<1x1x384xf32> to vector<1x8x384xf32>
    %346 = arith.mulf %344, %345 : vector<1x8x384xf32>
    %347 = arith.addf %337, %346 : vector<1x8x384xf32>
    %c0_190 = arith.constant 0 : index
    %c3_191 = arith.constant 3 : index
    %c19_192 = arith.constant 19 : index
    %348 = vector.load %arg1[%c0_190, %c3_191, %c19_192] : memref<1x4x512xf32, #tpu.memory_space<vmem>>, vector<1x1x384xf32>
    %349 = vector.shape_cast %348 : vector<1x1x384xf32> to vector<1x384xf32>
    %c3_193 = arith.constant 3 : index
    %c0_194 = arith.constant 0 : index
    %c4_195 = arith.constant 4 : index
    %350 = vector.load %arg2[%c3_193, %c0_194, %c4_195] : memref<4x8x9xf32, #tpu.memory_space<vmem>>, vector<1x8x1xf32>
    %351 = vector.shape_cast %350 : vector<1x8x1xf32> to vector<8x1xf32>
    %352 = vector.shape_cast %351 : vector<8x1xf32> to vector<1x8x1xf32>
    %353 = vector.shape_cast %349 : vector<1x384xf32> to vector<1x1x384xf32>
    %354 = vector.broadcast %352 : vector<1x8x1xf32> to vector<1x8x384xf32>
    %355 = vector.broadcast %353 : vector<1x1x384xf32> to vector<1x8x384xf32>
    %356 = arith.mulf %354, %355 : vector<1x8x384xf32>
    %357 = arith.addf %347, %356 : vector<1x8x384xf32>
    %c0_196 = arith.constant 0 : index
    %c3_197 = arith.constant 3 : index
    %c20_198 = arith.constant 20 : index
    %358 = vector.load %arg1[%c0_196, %c3_197, %c20_198] : memref<1x4x512xf32, #tpu.memory_space<vmem>>, vector<1x1x384xf32>
    %359 = vector.shape_cast %358 : vector<1x1x384xf32> to vector<1x384xf32>
    %c3_199 = arith.constant 3 : index
    %c0_200 = arith.constant 0 : index
    %c5_201 = arith.constant 5 : index
    %360 = vector.load %arg2[%c3_199, %c0_200, %c5_201] : memref<4x8x9xf32, #tpu.memory_space<vmem>>, vector<1x8x1xf32>
    %361 = vector.shape_cast %360 : vector<1x8x1xf32> to vector<8x1xf32>
    %362 = vector.shape_cast %361 : vector<8x1xf32> to vector<1x8x1xf32>
    %363 = vector.shape_cast %359 : vector<1x384xf32> to vector<1x1x384xf32>
    %364 = vector.broadcast %362 : vector<1x8x1xf32> to vector<1x8x384xf32>
    %365 = vector.broadcast %363 : vector<1x1x384xf32> to vector<1x8x384xf32>
    %366 = arith.mulf %364, %365 : vector<1x8x384xf32>
    %367 = arith.addf %357, %366 : vector<1x8x384xf32>
    %c0_202 = arith.constant 0 : index
    %c3_203 = arith.constant 3 : index
    %c36_204 = arith.constant 36 : index
    %368 = vector.load %arg1[%c0_202, %c3_203, %c36_204] : memref<1x4x512xf32, #tpu.memory_space<vmem>>, vector<1x1x384xf32>
    %369 = vector.shape_cast %368 : vector<1x1x384xf32> to vector<1x384xf32>
    %c3_205 = arith.constant 3 : index
    %c0_206 = arith.constant 0 : index
    %c6_207 = arith.constant 6 : index
    %370 = vector.load %arg2[%c3_205, %c0_206, %c6_207] : memref<4x8x9xf32, #tpu.memory_space<vmem>>, vector<1x8x1xf32>
    %371 = vector.shape_cast %370 : vector<1x8x1xf32> to vector<8x1xf32>
    %372 = vector.shape_cast %371 : vector<8x1xf32> to vector<1x8x1xf32>
    %373 = vector.shape_cast %369 : vector<1x384xf32> to vector<1x1x384xf32>
    %374 = vector.broadcast %372 : vector<1x8x1xf32> to vector<1x8x384xf32>
    %375 = vector.broadcast %373 : vector<1x1x384xf32> to vector<1x8x384xf32>
    %376 = arith.mulf %374, %375 : vector<1x8x384xf32>
    %377 = arith.addf %367, %376 : vector<1x8x384xf32>
    %c0_208 = arith.constant 0 : index
    %c3_209 = arith.constant 3 : index
    %c37_210 = arith.constant 37 : index
    %378 = vector.load %arg1[%c0_208, %c3_209, %c37_210] : memref<1x4x512xf32, #tpu.memory_space<vmem>>, vector<1x1x384xf32>
    %379 = vector.shape_cast %378 : vector<1x1x384xf32> to vector<1x384xf32>
    %c3_211 = arith.constant 3 : index
    %c0_212 = arith.constant 0 : index
    %c7_213 = arith.constant 7 : index
    %380 = vector.load %arg2[%c3_211, %c0_212, %c7_213] : memref<4x8x9xf32, #tpu.memory_space<vmem>>, vector<1x8x1xf32>
    %381 = vector.shape_cast %380 : vector<1x8x1xf32> to vector<8x1xf32>
    %382 = vector.shape_cast %381 : vector<8x1xf32> to vector<1x8x1xf32>
    %383 = vector.shape_cast %379 : vector<1x384xf32> to vector<1x1x384xf32>
    %384 = vector.broadcast %382 : vector<1x8x1xf32> to vector<1x8x384xf32>
    %385 = vector.broadcast %383 : vector<1x1x384xf32> to vector<1x8x384xf32>
    %386 = arith.mulf %384, %385 : vector<1x8x384xf32>
    %387 = arith.addf %377, %386 : vector<1x8x384xf32>
    %c0_214 = arith.constant 0 : index
    %c3_215 = arith.constant 3 : index
    %c38_216 = arith.constant 38 : index
    %388 = vector.load %arg1[%c0_214, %c3_215, %c38_216] : memref<1x4x512xf32, #tpu.memory_space<vmem>>, vector<1x1x384xf32>
    %389 = vector.shape_cast %388 : vector<1x1x384xf32> to vector<1x384xf32>
    %c3_217 = arith.constant 3 : index
    %c0_218 = arith.constant 0 : index
    %c8_219 = arith.constant 8 : index
    %390 = vector.load %arg2[%c3_217, %c0_218, %c8_219] : memref<4x8x9xf32, #tpu.memory_space<vmem>>, vector<1x8x1xf32>
    %391 = vector.shape_cast %390 : vector<1x8x1xf32> to vector<8x1xf32>
    %392 = vector.shape_cast %391 : vector<8x1xf32> to vector<1x8x1xf32>
    %393 = vector.shape_cast %389 : vector<1x384xf32> to vector<1x1x384xf32>
    %394 = vector.broadcast %392 : vector<1x8x1xf32> to vector<1x8x384xf32>
    %395 = vector.broadcast %393 : vector<1x1x384xf32> to vector<1x8x384xf32>
    %396 = arith.mulf %394, %395 : vector<1x8x384xf32>
    %397 = arith.addf %387, %396 : vector<1x8x384xf32>
    %c3_220 = arith.constant 3 : index
    %c0_221 = arith.constant 0 : index
    %c0_222 = arith.constant 0 : index
    %398 = vector.load %arg3[%c3_220, %c0_221, %c0_222] : memref<4x8x1xf32, #tpu.memory_space<vmem>>, vector<1x8x1xf32>
    %399 = vector.shape_cast %398 : vector<1x8x1xf32> to vector<8x1xf32>
    %400 = vector.shape_cast %399 : vector<8x1xf32> to vector<1x8x1xf32>
    %401 = vector.broadcast %400 : vector<1x8x1xf32> to vector<1x8x384xf32>
    %402 = arith.addf %397, %401 : vector<1x8x384xf32>
    %cst_223 = arith.constant 1.250000e+01 : f32
    %403 = vector.broadcast %cst_223 : f32 to vector<1x8x384xf32>
    %404 = arith.mulf %403, %402 : vector<1x8x384xf32>
    %405 = math.roundeven %404 : vector<1x8x384xf32>
    %cst_224 = arith.constant 8.000000e-02 : f32
    %406 = vector.broadcast %cst_224 : f32 to vector<1x8x384xf32>
    %407 = arith.mulf %405, %406 : vector<1x8x384xf32>
    %408 = arith.addf %306, %407 : vector<1x8x384xf32>
    %c0_225 = arith.constant 0 : index
    %c0_226 = arith.constant 0 : index
    %c0_227 = arith.constant 0 : index
    %409 = vector.load %arg4[%c0_225, %c0_226, %c0_227] : memref<1x8x384xf32, #tpu.memory_space<vmem>>, vector<1x8x384xf32>
    tpu.vector_store %arg4[%c0_225, %c0_226, %c0_227], %408 {strides = array<i32>} : memref<1x8x384xf32, #tpu.memory_space<vmem>>, vector<1x8x384xf32>,
    return
  }
  func.func @transform_0(%arg0: i32) -> (i32, i32, i32) {
    %c0_i32 = arith.constant 0 : i32
    %c0_i32_0 = arith.constant 0 : i32
    %c0_i32_1 = arith.constant 0 : i32
    return %arg0, %c0_i32, %c0_i32_0 : i32, i32, i32
  }
  func.func @transform_1(%arg0: i32) -> (i32, i32, i32) {
    %c0_i32 = arith.constant 0 : i32
    %c0_i32_0 = arith.constant 0 : i32
    %c0_i32_1 = arith.constant 0 : i32
    %c0_i32_2 = arith.constant 0 : i32
    return %c0_i32, %c0_i32_0, %c0_i32_1 : i32, i32, i32
  }
  func.func @transform_2(%arg0: i32) -> (i32, i32, i32) {
    %c0_i32 = arith.constant 0 : i32
    %c0_i32_0 = arith.constant 0 : i32
    %c0_i32_1 = arith.constant 0 : i32
    %c0_i32_2 = arith.constant 0 : i32
    return %c0_i32, %c0_i32_0, %c0_i32_1 : i32, i32, i32
  }
  func.func @transform_3(%arg0: i32) -> (i32, i32, i32) {
    %c0_i32 = arith.constant 0 : i32
    %c0_i32_0 = arith.constant 0 : i32
    %c0_i32_1 = arith.constant 0 : i32
    return %arg0, %c0_i32, %c0_i32_0 : i32, i32, i32
  }
}

</mosaic_0001>

<llo_original>
// kernel: demolition_conv2d.1
$region0: #{demolition_conv2d.1}
  #allocation0 [shape = 'u32[]', space=smem, size = 0x4, offset = 0x4, fixed_abs, tag = 'smem constant byte address 0x4 - core index']
  #allocation1 [shape = 'u32[144,128]{1,0:T(1,128)}', space=vmem, size = 0x12000, scoped, tag = 'internal scratch']
  %s0 = inlined_call_operand.vmem [shape: f32[2,4,512], index: 0, kind: input, shape index: {}]
  %s1 = inlined_call_operand.vmem [shape: f32[4,8,9], index: 1, kind: input, shape index: {}]
  %s2 = inlined_call_operand.vmem [shape: f32[4,8,1], index: 2, kind: input, shape index: {}]
  %s3 = inlined_call_operand.vmem [shape: f32[2,8,384], index: 3, kind: output, shape index: {}]
  %s4 = sld [smem:[#allocation0]]
  $region45: #{demolition_conv2d.1} parent=0
    _
  %s6 = ssub.s32 1, %s4
  %s7 = scalar_select 0, %s6, %s4
  loop: start=0, step=1, limit=4
  $region2: #{demolition_conv2d.1} parent=0 // loop_pre_header
    _
  $region3: #{demolition_conv2d.1} parent=0 // loop_header
    %s9 = sphi 0, %s13
    %p10 = scmp.ge.s32.totalorder %s9, 4
    %s19 = sphi 0, %s21
    %s22 = sphi 0, %s19
    %s23 = sphi 0, %s22
    %s39 = sphi 0, %s23
    %s43 = sphi 0, %s43
    %s45 = sphi 0, %s43
    %s46 = sphi 0, %s45
    %s60 = sphi 0, %s46
    %s64 = sphi 0, %s64
    %s66 = sphi 0, %s64
    %s67 = sphi 0, %s66
    %s81 = sphi 0, %s67
    %s87 = sphi 0, %s89
    %s90 = sphi 0, %s87
    %s91 = sphi 0, %s90
    %s107 = sphi 0, %s91
  $region4: #{demolition_conv2d.1} parent=0 // loop_header_branch
    %12 = sbr.rel (%p10) target = $region8
  $region5: #{demolition_conv2d.1} parent=0 // loop_body
    %s14 = ssub.s32 %s9, 1
    %s15 = ssub.s32 %s9, 2
    %s16 = sadd.s32 %s9, 1
    %s17 = ssub.s32 %s9, %s16
    %p18 = scmp.eq.s32.totalorder %s17, 0
    %s20 = sadd.s32 %s19, 1
    %s21 = scalar_select %p18, %s19, %s20
    %p24 = pneg %p18
    %p25 = scmp.eq.s32.totalorder %s9, 1
    %p26 = por %p24, %p25
    %p27 = scmp.ne.s32.totalorder %s19, %s22
    %p28 = scmp.eq.s32.totalorder %s9, 0
    %p29 = por %p27, %p28
    %p30 = scmp.ne.s32.totalorder %s19, %s22
    %p31 = scmp.eq.s32.totalorder %s14, 1
    %p32 = por %p30, %p31
    %p33 = scmp.ne.s32.totalorder %s22, %s23
    %p34 = scmp.eq.s32.totalorder %s14, 0
    %p35 = por %p33, %p34
    %p36 = scmp.ne.s32.totalorder %s22, %s23
    %p37 = scmp.eq.s32.totalorder %s15, 1
    %p38 = por %p36, %p37
    %p40 = scmp.ne.s32.totalorder %s23, %s39
    %p41 = scmp.eq.s32.totalorder %s15, 0
    %p42 = por %p40, %p41
    %s44 = sadd.s32 %s43, 1
    %p47 = scmp.eq.s32.totalorder %s9, 1
    %p48 = scmp.ne.s32.totalorder %s43, %s45
    %p49 = scmp.eq.s32.totalorder %s9, 0
    %p50 = por %p48, %p49
    %p51 = scmp.ne.s32.totalorder %s43, %s45
    %p52 = scmp.eq.s32.totalorder %s14, 1
    %p53 = por %p51, %p52
    %p54 = scmp.ne.s32.totalorder %s45, %s46
    %p55 = scmp.eq.s32.totalorder %s14, 0
    %p56 = por %p54, %p55
    %p57 = scmp.ne.s32.totalorder %s45, %s46
    %p58 = scmp.eq.s32.totalorder %s15, 1
    %p59 = por %p57, %p58
    %p61 = scmp.ne.s32.totalorder %s46, %s60
    %p62 = scmp.eq.s32.totalorder %s15, 0
    %p63 = por %p61, %p62
    %s65 = sadd.s32 %s64, 1
    %p68 = scmp.eq.s32.totalorder %s9, 1
    %p69 = scmp.ne.s32.totalorder %s64, %s66
    %p70 = scmp.eq.s32.totalorder %s9, 0
    %p71 = por %p69, %p70
    %p72 = scmp.ne.s32.totalorder %s64, %s66
    %p73 = scmp.eq.s32.totalorder %s14, 1
    %p74 = por %p72, %p73
    %p75 = scmp.ne.s32.totalorder %s66, %s67
    %p76 = scmp.eq.s32.totalorder %s14, 0
    %p77 = por %p75, %p76
    %p78 = scmp.ne.s32.totalorder %s66, %s67
    %p79 = scmp.eq.s32.totalorder %s15, 1
    %p80 = por %p78, %p79
    %p82 = scmp.ne.s32.totalorder %s67, %s81
    %p83 = scmp.eq.s32.totalorder %s15, 0
    %p84 = por %p82, %p83
    %s85 = ssub.s32 %s9, %s16
    %p86 = scmp.eq.s32.totalorder %s85, 0
    %s88 = sadd.s32 %s87, 1
    %s89 = scalar_select %p86, %s87, %s88
    %p92 = pneg %p86
    %p93 = scmp.eq.s32.totalorder %s9, 1
    %p94 = por %p92, %p93
    %p95 = scmp.ne.s32.totalorder %s87, %s90
    %p96 = scmp.eq.s32.totalorder %s9, 0
    %p97 = por %p95, %p96
    %p98 = scmp.ne.s32.totalorder %s87, %s90
    %p99 = scmp.eq.s32.totalorder %s14, 1
    %p100 = por %p98, %p99
    %p101 = scmp.ne.s32.totalorder %s90, %s91
    %p102 = scmp.eq.s32.totalorder %s14, 0
    %p103 = por %p101, %p102
    %p104 = scmp.ne.s32.totalorder %s90, %s91
    %p105 = scmp.eq.s32.totalorder %s15, 1
    %p106 = por %p104, %p105
    %p108 = scmp.ne.s32.totalorder %s91, %s107
    %p109 = scmp.eq.s32.totalorder %s15, 0
    %p110 = por %p108, %p109
    %p111 = scmp.le.s32.totalorder 1, %s9
    %p112 = scmp.lt.s32.totalorder %s9, 3
    %p113 = pnand %p111, %p112
    %p114 = pneg %p113
    // Predicated region
    $region9: #{demolition_conv2d.1} parent=5 // pred_check
      _
    $region10: #{demolition_conv2d.1} parent=5 // pred_check_branch
      %116 = sbr.rel (%p113) target = $region12
    $region11: #{demolition_conv2d.1} parent=5 // pred_region
      %s117 = ssub.s32 %s9, 1
      // Predicated region
      $region13: #{demolition_conv2d.1} parent=11 // pred_check
        %p118 = pneg %p56
      $region14: #{demolition_conv2d.1} parent=11 // pred_check_branch
        %120 = sbr.rel (%p118) target = $region16
      $region15: #{demolition_conv2d.1} parent=11 // pred_region
        _
      $region16: #{demolition_conv2d.1} parent=11 // pred_fallthru
        _
      // Predicated region
      $region17: #{demolition_conv2d.1} parent=11 // pred_check
        %p121 = pneg %p77
      $region18: #{demolition_conv2d.1} parent=11 // pred_check_branch
        %123 = sbr.rel (%p121) target = $region20
      $region19: #{demolition_conv2d.1} parent=11 // pred_region
        _
      $region20: #{demolition_conv2d.1} parent=11 // pred_fallthru
        _
    $region12: #{demolition_conv2d.1} parent=5 // pred_fallthru
      _
    %p124 = scmp.lt.s32.totalorder %s9, 2
    // Predicated region
    $region21: #{demolition_conv2d.1} parent=5 // pred_check
      %p125 = pneg %p124
    $region22: #{demolition_conv2d.1} parent=5 // pred_check_branch
      %127 = sbr.rel (%p125) target = $region24
    $region23: #{demolition_conv2d.1} parent=5 // pred_region
      // Predicated region
      $region25: #{demolition_conv2d.1} parent=23 // pred_check
        %p128 = pneg %p29
      $region26: #{demolition_conv2d.1} parent=23 // pred_check_branch
        %130 = sbr.rel (%p128) target = $region28
      $region27: #{demolition_conv2d.1} parent=23 // pred_region
        %p131 = scmp.lt.s32.totalorder %s9, 1
        %s132 = scalar_select %p131, %s9, 1
        %s133 = smul.addr %s132, 4
        %s134 = smul.addr %s133, 4
        %s135 = scalar_lea.vmem %s0, %s134
      $region28: #{demolition_conv2d.1} parent=23 // pred_fallthru
        _
    $region24: #{demolition_conv2d.1} parent=5 // pred_fallthru
      _
    %p136 = scmp.le.s32.totalorder 1, %s9
    %p137 = scmp.lt.s32.totalorder %s9, 3
    %p138 = pnand %p136, %p137
    %p139 = pneg %p138
    // Predicated region
    $region29: #{demolition_conv2d.1} parent=5 // pred_check
      _
    $region30: #{demolition_conv2d.1} parent=5 // pred_check_branch
      %141 = sbr.rel (%p138) target = $region32
    $region31: #{demolition_conv2d.1} parent=5 // pred_region
      %s142 = ssub.s32 %s9, 1
      %p143 = scmp.lt.s32.totalorder %s14, 1
      %s144 = scalar_select %p143, %s14, 1
      %s145 = smul.addr %s144, 4
      %s146 = smul.addr %s145, 4
      %s147 = scalar_lea.vmem %s0, %s146
      %p148 = pneg %p35
      %p149 = pneg %p32
      %p150 = pneg %p56
      %p151 = pneg %p53
      %p152 = pneg %p77
      %p153 = pneg %p74
      %p154 = pneg %p103
      %p155 = pneg %p100
      %p156 = scmp.lt.s32.totalorder %s14, 1
      %s157 = scalar_select %p156, %s14, 1
      %s158 = smul.addr %s157, 3
      %s159 = smul.addr %s158, 8
      %s160 = scalar_lea.vmem %s3, %s159
      %p161 = scmp.lt.s32.totalorder %s14, 1
      %s162 = scalar_select %p161, %s14, 1
      %s163 = smul.addr %s162, 4
      %s164 = smul.addr %s163, 4
      %s165 = scalar_lea.vmem %s0, %s164
      %p166 = scmp.lt.s32.totalorder %s14, 1
      %s167 = scalar_select %p166, %s14, 1
      %s168 = smul.addr %s167, 3
      %s169 = smul.addr %s168, 8
      %s170 = scalar_lea.vmem %s3, %s169
      %v171 = vld [vmem:[%s165] ss:$4 sm:$0x7]
      %v172 = vld [vmem:[%s1] sm:$0xff]
      %174 = vset.pattern.permute.xlu0 0
      %175 = vperm.xlu0 %174, %v172
      %v176 = vpop.permute.xlu0 %175
      %v179 = vlaneseq
      %v180 = vshrl.u32 %v179, 7
      %v181 = vsub.s32 0, %v180
      %v182 = vrot.slane %v171, %v181
      %v183 = vlaneseq
      %v184 = vshrl.u32 %v183, 7
      %v185 = vsub.s32 1, %v184
      %v186 = vrot.slane %v171, %v185
      %v187 = vlaneseq
      %v188 = vshrl.u32 %v187, 7
      %v189 = vsub.s32 2, %v188
      %v190 = vrot.slane %v171, %v189
      %v194 = vmul.f32 %v176, %v182
      %v195 = vmul.f32 %v176, %v186
      %v196 = vmul.f32 %v176, %v190
      %v197 = vadd.f32 %v194, 0.0
      %v198 = vadd.f32 %v195, 0.0
      %v199 = vadd.f32 %v196, 0.0
      %v200 = vld [vmem:[%s165] ss:$4 sm:$0xf]
      %201 = vset.pattern.permute.xlu0 1
      %202 = vperm.xlu0 %201, %v172
      %v203 = vpop.permute.xlu0 %202
      %v206 = vlaneseq
      %v207 = vshrl.u32 %v206, 7
      %v208 = vsub.s32 0, %v207
      %v209 = vrot.slane %v200, %v208
      %v210 = vlaneseq
      %v211 = vshrl.u32 %v210, 7
      %v212 = vsub.s32 1, %v211
      %v213 = vrot.slane %v200, %v212
      %v214 = vlaneseq
      %v215 = vshrl.u32 %v214, 7
      %v216 = vsub.s32 2, %v215
      %v217 = vrot.slane %v200, %v216
      %v218 = vlaneseq
      %v219 = vshrl.u32 %v218, 7
      %v220 = vsub.s32 3, %v219
      %v221 = vrot.slane %v200, %v220
      %v226 = vmul.f32 %v203, %v209
      %v227 = vmul.f32 %v203, %v213
      %v228 = vmul.f32 %v203, %v217
      %v229 = vmul.f32 %v203, %v221
      %234 = vrot.lane.b32.xlu0 %v226, 127
      %v235 = vpop.permute.xlu0 %234
      %236 = vrot.lane.b32.xlu0 %v227, 127
      %v237 = vpop.permute.xlu0 %236
      %238 = vrot.lane.b32.xlu0 %v228, 127
      %v239 = vpop.permute.xlu0 %238
      %240 = vrot.lane.b32.xlu0 %v229, 127
      %v241 = vpop.permute.xlu0 %240
      %vm242 = vcmask 1039360
      %v243 = vsel %vm242, %v235, %v237
      %v244 = vsel %vm242, %v237, %v239
      %v245 = vsel %vm242, %v239, %v241
      %v249 = vadd.f32 %v197, %v243
      %v250 = vadd.f32 %v198, %v244
      %v251 = vadd.f32 %v199, %v245
      %252 = vset.pattern.permute.xlu0 2
      %253 = vperm.xlu0 %252, %v172
      %v254 = vpop.permute.xlu0 %253
      %v256 = vmul.f32 %v254, %v209
      %v257 = vmul.f32 %v254, %v213
      %v258 = vmul.f32 %v254, %v217
      %v259 = vmul.f32 %v254, %v221
      %264 = vrot.lane.b32.xlu0 %v256, 126
      %v265 = vpop.permute.xlu0 %264
      %266 = vrot.lane.b32.xlu0 %v257, 126
      %v267 = vpop.permute.xlu0 %266
      %268 = vrot.lane.b32.xlu0 %v258, 126
      %v269 = vpop.permute.xlu0 %268
      %270 = vrot.lane.b32.xlu0 %v259, 126
      %v271 = vpop.permute.xlu0 %270
      %vm272 = vcmask 1031168
      %v273 = vsel %vm272, %v265, %v267
      %v274 = vsel %vm272, %v267, %v269
      %v275 = vsel %vm272, %v269, %v271
      %v279 = vadd.f32 %v249, %v273
      %v280 = vadd.f32 %v250, %v274
      %v281 = vadd.f32 %v251, %v275
      %282 = vset.pattern.permute.xlu0 3
      %283 = vperm.xlu0 %282, %v172
      %v284 = vpop.permute.xlu0 %283
      %v286 = vmul.f32 %v284, %v209
      %v287 = vmul.f32 %v284, %v213
      %v288 = vmul.f32 %v284, %v217
      %v289 = vmul.f32 %v284, %v221
      %294 = vrot.lane.b32.xlu0 %v286, 110
      %v295 = vpop.permute.xlu0 %294
      %296 = vrot.lane.b32.xlu0 %v287, 110
      %v297 = vpop.permute.xlu0 %296
      %298 = vrot.lane.b32.xlu0 %v288, 110
      %v299 = vpop.permute.xlu0 %298
      %300 = vrot.lane.b32.xlu0 %v289, 110
      %v301 = vpop.permute.xlu0 %300
      %vm302 = vcmask 900096
      %v303 = vsel %vm302, %v295, %v297
      %v304 = vsel %vm302, %v297, %v299
      %v305 = vsel %vm302, %v299, %v301
      %v309 = vadd.f32 %v279, %v303
      %v310 = vadd.f32 %v280, %v304
      %v311 = vadd.f32 %v281, %v305
      %312 = vset.pattern.permute.xlu0 4
      %313 = vperm.xlu0 %312, %v172
      %v314 = vpop.permute.xlu0 %313
      %v316 = vmul.f32 %v314, %v209
      %v317 = vmul.f32 %v314, %v213
      %v318 = vmul.f32 %v314, %v217
      %v319 = vmul.f32 %v314, %v221
      %324 = vrot.lane.b32.xlu0 %v316, 109
      %v325 = vpop.permute.xlu0 %324
      %326 = vrot.lane.b32.xlu0 %v317, 109
      %v327 = vpop.permute.xlu0 %326
      %328 = vrot.lane.b32.xlu0 %v318, 109
      %v329 = vpop.permute.xlu0 %328
      %330 = vrot.lane.b32.xlu0 %v319, 109
      %v331 = vpop.permute.xlu0 %330
      %vm332 = vcmask 891904
      %v333 = vsel %vm332, %v325, %v327
      %v334 = vsel %vm332, %v327, %v329
      %v335 = vsel %vm332, %v329, %v331
      %v339 = vadd.f32 %v309, %v333
      %v340 = vadd.f32 %v310, %v334
      %v341 = vadd.f32 %v311, %v335
      %342 = vset.pattern.permute.xlu0 5
      %343 = vperm.xlu0 %342, %v172
      %v344 = vpop.permute.xlu0 %343
      %v346 = vmul.f32 %v344, %v209
      %v347 = vmul.f32 %v344, %v213
      %v348 = vmul.f32 %v344, %v217
      %v349 = vmul.f32 %v344, %v221
      %354 = vrot.lane.b32.xlu0 %v346, 108
      %v355 = vpop.permute.xlu0 %354
      %356 = vrot.lane.b32.xlu0 %v347, 108
      %v357 = vpop.permute.xlu0 %356
      %358 = vrot.lane.b32.xlu0 %v348, 108
      %v359 = vpop.permute.xlu0 %358
      %360 = vrot.lane.b32.xlu0 %v349, 108
      %v361 = vpop.permute.xlu0 %360
      %vm362 = vcmask 883712
      %v363 = vsel %vm362, %v355, %v357
      %v364 = vsel %vm362, %v357, %v359
      %v365 = vsel %vm362, %v359, %v361
      %v369 = vadd.f32 %v339, %v363
      %v370 = vadd.f32 %v340, %v364
      %v371 = vadd.f32 %v341, %v365
      %372 = vset.pattern.permute.xlu0 6
      %373 = vperm.xlu0 %372, %v172
      %v374 = vpop.permute.xlu0 %373
      %v376 = vmul.f32 %v374, %v209
      %v377 = vmul.f32 %v374, %v213
      %v378 = vmul.f32 %v374, %v217
      %v379 = vmul.f32 %v374, %v221
      %384 = vrot.lane.b32.xlu0 %v376, 92
      %v385 = vpop.permute.xlu0 %384
      %386 = vrot.lane.b32.xlu0 %v377, 92
      %v387 = vpop.permute.xlu0 %386
      %388 = vrot.lane.b32.xlu0 %v378, 92
      %v389 = vpop.permute.xlu0 %388
      %390 = vrot.lane.b32.xlu0 %v379, 92
      %v391 = vpop.permute.xlu0 %390
      %vm392 = vcmask 752640
      %v393 = vsel %vm392, %v385, %v387
      %v394 = vsel %vm392, %v387, %v389
      %v395 = vsel %vm392, %v389, %v391
      %v399 = vadd.f32 %v369, %v393
      %v400 = vadd.f32 %v370, %v394
      %v401 = vadd.f32 %v371, %v395
      %402 = vset.pattern.permute.xlu0 7
      %403 = vperm.xlu0 %402, %v172
      %v404 = vpop.permute.xlu0 %403
      %v406 = vmul.f32 %v404, %v209
      %v407 = vmul.f32 %v404, %v213
      %v408 = vmul.f32 %v404, %v217
      %v409 = vmul.f32 %v404, %v221
      %414 = vrot.lane.b32.xlu0 %v406, 91
      %v415 = vpop.permute.xlu0 %414
      %416 = vrot.lane.b32.xlu0 %v407, 91
      %v417 = vpop.permute.xlu0 %416
      %418 = vrot.lane.b32.xlu0 %v408, 91
      %v419 = vpop.permute.xlu0 %418
      %420 = vrot.lane.b32.xlu0 %v409, 91
      %v421 = vpop.permute.xlu0 %420
      %vm422 = vcmask 744448
      %v423 = vsel %vm422, %v415, %v417
      %v424 = vsel %vm422, %v417, %v419
      %v425 = vsel %vm422, %v419, %v421
      %v429 = vadd.f32 %v399, %v423
      %v430 = vadd.f32 %v400, %v424
      %v431 = vadd.f32 %v401, %v425
      %432 = vset.pattern.permute.xlu0 8
      %433 = vperm.xlu0 %432, %v172
      %v434 = vpop.permute.xlu0 %433
      %v436 = vmul.f32 %v434, %v209
      %v437 = vmul.f32 %v434, %v213
      %v438 = vmul.f32 %v434, %v217
      %v439 = vmul.f32 %v434, %v221
      %444 = vrot.lane.b32.xlu0 %v436, 90
      %v445 = vpop.permute.xlu0 %444
      %446 = vrot.lane.b32.xlu0 %v437, 90
      %v447 = vpop.permute.xlu0 %446
      %448 = vrot.lane.b32.xlu0 %v438, 90
      %v449 = vpop.permute.xlu0 %448
      %450 = vrot.lane.b32.xlu0 %v439, 90
      %v451 = vpop.permute.xlu0 %450
      %vm452 = vcmask 736256
      %v453 = vsel %vm452, %v445, %v447
      %v454 = vsel %vm452, %v447, %v449
      %v455 = vsel %vm452, %v449, %v451
      %v459 = vadd.f32 %v429, %v453
      %v460 = vadd.f32 %v430, %v454
      %v461 = vadd.f32 %v431, %v455
      %v462 = vld [vmem:[%s2] sm:$0xff]
      %464 = vset.pattern.permute.xlu0 0
      %465 = vperm.xlu0 %464, %v462
      %v466 = vpop.permute.xlu0 %465
      %v468 = vadd.f32 %v459, %v466
      %v469 = vadd.f32 %v460, %v466
      %v470 = vadd.f32 %v461, %v466
      %v471 = vmul.f32 %v468, 12.5
      %v472 = vmul.f32 %v469, 12.5
      %v473 = vmul.f32 %v470, 12.5
      %v474 = vround.ne.pseudo %v471
      %v475 = vround.ne.pseudo %v472
      %v476 = vround.ne.pseudo %v473
      %v477 = vmul.f32 %v474, 0.08
      %v478 = vmul.f32 %v475, 0.08
      %v479 = vmul.f32 %v476, 0.08
      %v480 = vadd.f32 %v477, 0.0
      %v481 = vadd.f32 %v478, 0.0
      %v482 = vadd.f32 %v479, 0.0
      %s483 = scalar_lea.vmem %s165, 1
      %v484 = vld [vmem:[%s483] ss:$4 sm:$0x7]
      %s485 = scalar_lea.vmem %s1, 8
      %v486 = vld [vmem:[%s485] sm:$0xff]
      %488 = vset.pattern.permute.xlu0 0
      %489 = vperm.xlu0 %488, %v486
      %v490 = vpop.permute.xlu0 %489
      %v493 = vlaneseq
      %v494 = vshrl.u32 %v493, 7
      %v495 = vsub.s32 0, %v494
      %v496 = vrot.slane %v484, %v495
      %v497 = vlaneseq
      %v498 = vshrl.u32 %v497, 7
      %v499 = vsub.s32 1, %v498
      %v500 = vrot.slane %v484, %v499
      %v501 = vlaneseq
      %v502 = vshrl.u32 %v501, 7
      %v503 = vsub.s32 2, %v502
      %v504 = vrot.slane %v484, %v503
      %v508 = vmul.f32 %v490, %v496
      %v509 = vmul.f32 %v490, %v500
      %v510 = vmul.f32 %v490, %v504
      %v511 = vadd.f32 %v508, 0.0
      %v512 = vadd.f32 %v509, 0.0
      %v513 = vadd.f32 %v510, 0.0
      %s514 = scalar_lea.vmem %s165, 1
      %v515 = vld [vmem:[%s514] ss:$4 sm:$0xf]
      %516 = vset.pattern.permute.xlu0 1
      %517 = vperm.xlu0 %516, %v486
      %v518 = vpop.permute.xlu0 %517
      %v521 = vlaneseq
      %v522 = vshrl.u32 %v521, 7
      %v523 = vsub.s32 0, %v522
      %v524 = vrot.slane %v515, %v523
      %v525 = vlaneseq
      %v526 = vshrl.u32 %v525, 7
      %v527 = vsub.s32 1, %v526
      %v528 = vrot.slane %v515, %v527
      %v529 = vlaneseq
      %v530 = vshrl.u32 %v529, 7
      %v531 = vsub.s32 2, %v530
      %v532 = vrot.slane %v515, %v531
      %v533 = vlaneseq
      %v534 = vshrl.u32 %v533, 7
      %v535 = vsub.s32 3, %v534
      %v536 = vrot.slane %v515, %v535
      %v541 = vmul.f32 %v518, %v524
      %v542 = vmul.f32 %v518, %v528
      %v543 = vmul.f32 %v518, %v532
      %v544 = vmul.f32 %v518, %v536
      %549 = vrot.lane.b32.xlu0 %v541, 127
      %v550 = vpop.permute.xlu0 %549
      %551 = vrot.lane.b32.xlu0 %v542, 127
      %v552 = vpop.permute.xlu0 %551
      %553 = vrot.lane.b32.xlu0 %v543, 127
      %v554 = vpop.permute.xlu0 %553
      %555 = vrot.lane.b32.xlu0 %v544, 127
      %v556 = vpop.permute.xlu0 %555
      %v557 = vsel %vm242, %v550, %v552
      %v558 = vsel %vm242, %v552, %v554
      %v559 = vsel %vm242, %v554, %v556
      %v563 = vadd.f32 %v511, %v557
      %v564 = vadd.f32 %v512, %v558
      %v565 = vadd.f32 %v513, %v559
      %566 = vset.pattern.permute.xlu0 2
      %567 = vperm.xlu0 %566, %v486
      %v568 = vpop.permute.xlu0 %567
      %v570 = vmul.f32 %v568, %v524
      %v571 = vmul.f32 %v568, %v528
      %v572 = vmul.f32 %v568, %v532
      %v573 = vmul.f32 %v568, %v536
      %578 = vrot.lane.b32.xlu0 %v570, 126
      %v579 = vpop.permute.xlu0 %578
      %580 = vrot.lane.b32.xlu0 %v571, 126
      %v581 = vpop.permute.xlu0 %580
      %582 = vrot.lane.b32.xlu0 %v572, 126
      %v583 = vpop.permute.xlu0 %582
      %584 = vrot.lane.b32.xlu0 %v573, 126
      %v585 = vpop.permute.xlu0 %584
      %v586 = vsel %vm272, %v579, %v581
      %v587 = vsel %vm272, %v581, %v583
      %v588 = vsel %vm272, %v583, %v585
      %v592 = vadd.f32 %v563, %v586
      %v593 = vadd.f32 %v564, %v587
      %v594 = vadd.f32 %v565, %v588
      %595 = vset.pattern.permute.xlu0 3
      %596 = vperm.xlu0 %595, %v486
      %v597 = vpop.permute.xlu0 %596
      %v599 = vmul.f32 %v597, %v524
      %v600 = vmul.f32 %v597, %v528
      %v601 = vmul.f32 %v597, %v532
      %v602 = vmul.f32 %v597, %v536
      %607 = vrot.lane.b32.xlu0 %v599, 110
      %v608 = vpop.permute.xlu0 %607
      %609 = vrot.lane.b32.xlu0 %v600, 110
      %v610 = vpop.permute.xlu0 %609
      %611 = vrot.lane.b32.xlu0 %v601, 110
      %v612 = vpop.permute.xlu0 %611
      %613 = vrot.lane.b32.xlu0 %v602, 110
      %v614 = vpop.permute.xlu0 %613
      %v615 = vsel %vm302, %v608, %v610
      %v616 = vsel %vm302, %v610, %v612
      %v617 = vsel %vm302, %v612, %v614
      %v621 = vadd.f32 %v592, %v615
      %v622 = vadd.f32 %v593, %v616
      %v623 = vadd.f32 %v594, %v617
      %624 = vset.pattern.permute.xlu0 4
      %625 = vperm.xlu0 %624, %v486
      %v626 = vpop.permute.xlu0 %625
      %v628 = vmul.f32 %v626, %v524
      %v629 = vmul.f32 %v626, %v528
      %v630 = vmul.f32 %v626, %v532
      %v631 = vmul.f32 %v626, %v536
      %636 = vrot.lane.b32.xlu0 %v628, 109
      %v637 = vpop.permute.xlu0 %636
      %638 = vrot.lane.b32.xlu0 %v629, 109
      %v639 = vpop.permute.xlu0 %638
      %640 = vrot.lane.b32.xlu0 %v630, 109
      %v641 = vpop.permute.xlu0 %640
      %642 = vrot.lane.b32.xlu0 %v631, 109
      %v643 = vpop.permute.xlu0 %642
      %v644 = vsel %vm332, %v637, %v639
      %v645 = vsel %vm332, %v639, %v641
      %v646 = vsel %vm332, %v641, %v643
      %v650 = vadd.f32 %v621, %v644
      %v651 = vadd.f32 %v622, %v645
      %v652 = vadd.f32 %v623, %v646
      %653 = vset.pattern.permute.xlu0 5
      %654 = vperm.xlu0 %653, %v486
      %v655 = vpop.permute.xlu0 %654
      %v657 = vmul.f32 %v655, %v524
      %v658 = vmul.f32 %v655, %v528
      %v659 = vmul.f32 %v655, %v532
      %v660 = vmul.f32 %v655, %v536
      %665 = vrot.lane.b32.xlu0 %v657, 108
      %v666 = vpop.permute.xlu0 %665
      %667 = vrot.lane.b32.xlu0 %v658, 108
      %v668 = vpop.permute.xlu0 %667
      %669 = vrot.lane.b32.xlu0 %v659, 108
      %v670 = vpop.permute.xlu0 %669
      %671 = vrot.lane.b32.xlu0 %v660, 108
      %v672 = vpop.permute.xlu0 %671
      %v673 = vsel %vm362, %v666, %v668
      %v674 = vsel %vm362, %v668, %v670
      %v675 = vsel %vm362, %v670, %v672
      %v679 = vadd.f32 %v650, %v673
      %v680 = vadd.f32 %v651, %v674
      %v681 = vadd.f32 %v652, %v675
      %682 = vset.pattern.permute.xlu0 6
      %683 = vperm.xlu0 %682, %v486
      %v684 = vpop.permute.xlu0 %683
      %v686 = vmul.f32 %v684, %v524
      %v687 = vmul.f32 %v684, %v528
      %v688 = vmul.f32 %v684, %v532
      %v689 = vmul.f32 %v684, %v536
      %694 = vrot.lane.b32.xlu0 %v686, 92
      %v695 = vpop.permute.xlu0 %694
      %696 = vrot.lane.b32.xlu0 %v687, 92
      %v697 = vpop.permute.xlu0 %696
      %698 = vrot.lane.b32.xlu0 %v688, 92
      %v699 = vpop.permute.xlu0 %698
      %700 = vrot.lane.b32.xlu0 %v689, 92
      %v701 = vpop.permute.xlu0 %700
      %v702 = vsel %vm392, %v695, %v697
      %v703 = vsel %vm392, %v697, %v699
      %v704 = vsel %vm392, %v699, %v701
      %v708 = vadd.f32 %v679, %v702
      %v709 = vadd.f32 %v680, %v703
      %v710 = vadd.f32 %v681, %v704
      %711 = vset.pattern.permute.xlu0 7
      %712 = vperm.xlu0 %711, %v486
      %v713 = vpop.permute.xlu0 %712
      %v715 = vmul.f32 %v713, %v524
      %v716 = vmul.f32 %v713, %v528
      %v717 = vmul.f32 %v713, %v532
      %v718 = vmul.f32 %v713, %v536
      %723 = vrot.lane.b32.xlu0 %v715, 91
      %v724 = vpop.permute.xlu0 %723
      %725 = vrot.lane.b32.xlu0 %v716, 91
      %v726 = vpop.permute.xlu0 %725
      %727 = vrot.lane.b32.xlu0 %v717, 91
      %v728 = vpop.permute.xlu0 %727
      %729 = vrot.lane.b32.xlu0 %v718, 91
      %v730 = vpop.permute.xlu0 %729
      %v731 = vsel %vm422, %v724, %v726
      %v732 = vsel %vm422, %v726, %v728
      %v733 = vsel %vm422, %v728, %v730
      %v737 = vadd.f32 %v708, %v731
      %v738 = vadd.f32 %v709, %v732
      %v739 = vadd.f32 %v710, %v733
      %740 = vset.pattern.permute.xlu0 8
      %741 = vperm.xlu0 %740, %v486
      %v742 = vpop.permute.xlu0 %741
      %v744 = vmul.f32 %v742, %v524
      %v745 = vmul.f32 %v742, %v528
      %v746 = vmul.f32 %v742, %v532
      %v747 = vmul.f32 %v742, %v536
      %752 = vrot.lane.b32.xlu0 %v744, 90
      %v753 = vpop.permute.xlu0 %752
      %754 = vrot.lane.b32.xlu0 %v745, 90
      %v755 = vpop.permute.xlu0 %754
      %756 = vrot.lane.b32.xlu0 %v746, 90
      %v757 = vpop.permute.xlu0 %756
      %758 = vrot.lane.b32.xlu0 %v747, 90
      %v759 = vpop.permute.xlu0 %758
      %v760 = vsel %vm452, %v753, %v755
      %v761 = vsel %vm452, %v755, %v757
      %v762 = vsel %vm452, %v757, %v759
      %v766 = vadd.f32 %v737, %v760
      %v767 = vadd.f32 %v738, %v761
      %v768 = vadd.f32 %v739, %v762
      %s769 = scalar_lea.vmem %s2, 8
      %v770 = vld [vmem:[%s769] sm:$0xff]
      %772 = vset.pattern.permute.xlu0 0
      %773 = vperm.xlu0 %772, %v770
      %v774 = vpop.permute.xlu0 %773
      %v776 = vadd.f32 %v766, %v774
      %v777 = vadd.f32 %v767, %v774
      %v778 = vadd.f32 %v768, %v774
      %v779 = vmul.f32 %v776, 12.5
      %v780 = vmul.f32 %v777, 12.5
      %v781 = vmul.f32 %v778, 12.5
      %v782 = vround.ne.pseudo %v779
      %v783 = vround.ne.pseudo %v780
      %v784 = vround.ne.pseudo %v781
      %v785 = vmul.f32 %v782, 0.08
      %v786 = vmul.f32 %v783, 0.08
      %v787 = vmul.f32 %v784, 0.08
      %v788 = vadd.f32 %v480, %v785
      %v789 = vadd.f32 %v481, %v786
      %v790 = vadd.f32 %v482, %v787
      %s791 = scalar_lea.vmem %s165, 2
      %v792 = vld [vmem:[%s791] ss:$4 sm:$0x7]
      %s793 = scalar_lea.vmem %s1, 16
      %v794 = vld [vmem:[%s793] sm:$0xff]
      %796 = vset.pattern.permute.xlu0 0
      %797 = vperm.xlu0 %796, %v794
      %v798 = vpop.permute.xlu0 %797
      %v801 = vlaneseq
      %v802 = vshrl.u32 %v801, 7
      %v803 = vsub.s32 0, %v802
      %v804 = vrot.slane %v792, %v803
      %v805 = vlaneseq
      %v806 = vshrl.u32 %v805, 7
      %v807 = vsub.s32 1, %v806
      %v808 = vrot.slane %v792, %v807
      %v809 = vlaneseq
      %v810 = vshrl.u32 %v809, 7
      %v811 = vsub.s32 2, %v810
      %v812 = vrot.slane %v792, %v811
      %v816 = vmul.f32 %v798, %v804
      %v817 = vmul.f32 %v798, %v808
      %v818 = vmul.f32 %v798, %v812
      %v819 = vadd.f32 %v816, 0.0
      %v820 = vadd.f32 %v817, 0.0
      %v821 = vadd.f32 %v818, 0.0
      %s822 = scalar_lea.vmem %s165, 2
      %v823 = vld [vmem:[%s822] ss:$4 sm:$0xf]
      %824 = vset.pattern.permute.xlu0 1
      %825 = vperm.xlu0 %824, %v794
      %v826 = vpop.permute.xlu0 %825
      %v829 = vlaneseq
      %v830 = vshrl.u32 %v829, 7
      %v831 = vsub.s32 0, %v830
      %v832 = vrot.slane %v823, %v831
      %v833 = vlaneseq
      %v834 = vshrl.u32 %v833, 7
      %v835 = vsub.s32 1, %v834
      %v836 = vrot.slane %v823, %v835
      %v837 = vlaneseq
      %v838 = vshrl.u32 %v837, 7
      %v839 = vsub.s32 2, %v838
      %v840 = vrot.slane %v823, %v839
      %v841 = vlaneseq
      %v842 = vshrl.u32 %v841, 7
      %v843 = vsub.s32 3, %v842
      %v844 = vrot.slane %v823, %v843
      %v849 = vmul.f32 %v826, %v832
      %v850 = vmul.f32 %v826, %v836
      %v851 = vmul.f32 %v826, %v840
      %v852 = vmul.f32 %v826, %v844
      %857 = vrot.lane.b32.xlu0 %v849, 127
      %v858 = vpop.permute.xlu0 %857
      %859 = vrot.lane.b32.xlu0 %v850, 127
      %v860 = vpop.permute.xlu0 %859
      %861 = vrot.lane.b32.xlu0 %v851, 127
      %v862 = vpop.permute.xlu0 %861
      %863 = vrot.lane.b32.xlu0 %v852, 127
      %v864 = vpop.permute.xlu0 %863
      %v865 = vsel %vm242, %v858, %v860
      %v866 = vsel %vm242, %v860, %v862
      %v867 = vsel %vm242, %v862, %v864
      %v871 = vadd.f32 %v819, %v865
      %v872 = vadd.f32 %v820, %v866
      %v873 = vadd.f32 %v821, %v867
      %874 = vset.pattern.permute.xlu0 2
      %875 = vperm.xlu0 %874, %v794
      %v876 = vpop.permute.xlu0 %875
      %v878 = vmul.f32 %v876, %v832
      %v879 = vmul.f32 %v876, %v836
      %v880 = vmul.f32 %v876, %v840
      %v881 = vmul.f32 %v876, %v844
      %886 = vrot.lane.b32.xlu0 %v878, 126
      %v887 = vpop.permute.xlu0 %886
      %888 = vrot.lane.b32.xlu0 %v879, 126
      %v889 = vpop.permute.xlu0 %888
      %890 = vrot.lane.b32.xlu0 %v880, 126
      %v891 = vpop.permute.xlu0 %890
      %892 = vrot.lane.b32.xlu0 %v881, 126
      %v893 = vpop.permute.xlu0 %892
      %v894 = vsel %vm272, %v887, %v889
      %v895 = vsel %vm272, %v889, %v891
      %v896 = vsel %vm272, %v891, %v893
      %v900 = vadd.f32 %v871, %v894
      %v901 = vadd.f32 %v872, %v895
      %v902 = vadd.f32 %v873, %v896
      %903 = vset.pattern.permute.xlu0 3
      %904 = vperm.xlu0 %903, %v794
      %v905 = vpop.permute.xlu0 %904
      %v907 = vmul.f32 %v905, %v832
      %v908 = vmul.f32 %v905, %v836
      %v909 = vmul.f32 %v905, %v840
      %v910 = vmul.f32 %v905, %v844
      %915 = vrot.lane.b32.xlu0 %v907, 110
      %v916 = vpop.permute.xlu0 %915
      %917 = vrot.lane.b32.xlu0 %v908, 110
      %v918 = vpop.permute.xlu0 %917
      %919 = vrot.lane.b32.xlu0 %v909, 110
      %v920 = vpop.permute.xlu0 %919
      %921 = vrot.lane.b32.xlu0 %v910, 110
      %v922 = vpop.permute.xlu0 %921
      %v923 = vsel %vm302, %v916, %v918
      %v924 = vsel %vm302, %v918, %v920
      %v925 = vsel %vm302, %v920, %v922
      %v929 = vadd.f32 %v900, %v923
      %v930 = vadd.f32 %v901, %v924
      %v931 = vadd.f32 %v902, %v925
      %932 = vset.pattern.permute.xlu0 4
      %933 = vperm.xlu0 %932, %v794
      %v934 = vpop.permute.xlu0 %933
      %v936 = vmul.f32 %v934, %v832
      %v937 = vmul.f32 %v934, %v836
      %v938 = vmul.f32 %v934, %v840
      %v939 = vmul.f32 %v934, %v844
      %944 = vrot.lane.b32.xlu0 %v936, 109
      %v945 = vpop.permute.xlu0 %944
      %946 = vrot.lane.b32.xlu0 %v937, 109
      %v947 = vpop.permute.xlu0 %946
      %948 = vrot.lane.b32.xlu0 %v938, 109
      %v949 = vpop.permute.xlu0 %948
      %950 = vrot.lane.b32.xlu0 %v939, 109
      %v951 = vpop.permute.xlu0 %950
      %v952 = vsel %vm332, %v945, %v947
      %v953 = vsel %vm332, %v947, %v949
      %v954 = vsel %vm332, %v949, %v951
      %v958 = vadd.f32 %v929, %v952
      %v959 = vadd.f32 %v930, %v953
      %v960 = vadd.f32 %v931, %v954
      %961 = vset.pattern.permute.xlu0 5
      %962 = vperm.xlu0 %961, %v794
      %v963 = vpop.permute.xlu0 %962
      %v965 = vmul.f32 %v963, %v832
      %v966 = vmul.f32 %v963, %v836
      %v967 = vmul.f32 %v963, %v840
      %v968 = vmul.f32 %v963, %v844
      %973 = vrot.lane.b32.xlu0 %v965, 108
      %v974 = vpop.permute.xlu0 %973
      %975 = vrot.lane.b32.xlu0 %v966, 108
      %v976 = vpop.permute.xlu0 %975
      %977 = vrot.lane.b32.xlu0 %v967, 108
      %v978 = vpop.permute.xlu0 %977
      %979 = vrot.lane.b32.xlu0 %v968, 108
      %v980 = vpop.permute.xlu0 %979
      %v981 = vsel %vm362, %v974, %v976
      %v982 = vsel %vm362, %v976, %v978
      %v983 = vsel %vm362, %v978, %v980
      %v987 = vadd.f32 %v958, %v981
      %v988 = vadd.f32 %v959, %v982
      %v989 = vadd.f32 %v960, %v983
      %990 = vset.pattern.permute.xlu0 6
      %991 = vperm.xlu0 %990, %v794
      %v992 = vpop.permute.xlu0 %991
      %v994 = vmul.f32 %v992, %v832
      %v995 = vmul.f32 %v992, %v836
      %v996 = vmul.f32 %v992, %v840
      %v997 = vmul.f32 %v992, %v844
      %1002 = vrot.lane.b32.xlu0 %v994, 92
      %v1003 = vpop.permute.xlu0 %1002
      %1004 = vrot.lane.b32.xlu0 %v995, 92
      %v1005 = vpop.permute.xlu0 %1004
      %1006 = vrot.lane.b32.xlu0 %v996, 92
      %v1007 = vpop.permute.xlu0 %1006
      %1008 = vrot.lane.b32.xlu0 %v997, 92
      %v1009 = vpop.permute.xlu0 %1008
      %v1010 = vsel %vm392, %v1003, %v1005
      %v1011 = vsel %vm392, %v1005, %v1007
      %v1012 = vsel %vm392, %v1007, %v1009
      %v1016 = vadd.f32 %v987, %v1010
      %v1017 = vadd.f32 %v988, %v1011
      %v1018 = vadd.f32 %v989, %v1012
      %1019 = vset.pattern.permute.xlu0 7
      %1020 = vperm.xlu0 %1019, %v794
      %v1021 = vpop.permute.xlu0 %1020
      %v1023 = vmul.f32 %v1021, %v832
      %v1024 = vmul.f32 %v1021, %v836
      %v1025 = vmul.f32 %v1021, %v840
      %v1026 = vmul.f32 %v1021, %v844
      %1031 = vrot.lane.b32.xlu0 %v1023, 91
      %v1032 = vpop.permute.xlu0 %1031
      %1033 = vrot.lane.b32.xlu0 %v1024, 91
      %v1034 = vpop.permute.xlu0 %1033
      %1035 = vrot.lane.b32.xlu0 %v1025, 91
      %v1036 = vpop.permute.xlu0 %1035
      %1037 = vrot.lane.b32.xlu0 %v1026, 91
      %v1038 = vpop.permute.xlu0 %1037
      %v1039 = vsel %vm422, %v1032, %v1034
      %v1040 = vsel %vm422, %v1034, %v1036
      %v1041 = vsel %vm422, %v1036, %v1038
      %v1045 = vadd.f32 %v1016, %v1039
      %v1046 = vadd.f32 %v1017, %v1040
      %v1047 = vadd.f32 %v1018, %v1041
      %1048 = vset.pattern.permute.xlu0 8
      %1049 = vperm.xlu0 %1048, %v794
      %v1050 = vpop.permute.xlu0 %1049
      %v1052 = vmul.f32 %v1050, %v832
      %v1053 = vmul.f32 %v1050, %v836
      %v1054 = vmul.f32 %v1050, %v840
      %v1055 = vmul.f32 %v1050, %v844
      %1060 = vrot.lane.b32.xlu0 %v1052, 90
      %v1061 = vpop.permute.xlu0 %1060
      %1062 = vrot.lane.b32.xlu0 %v1053, 90
      %v1063 = vpop.permute.xlu0 %1062
      %1064 = vrot.lane.b32.xlu0 %v1054, 90
      %v1065 = vpop.permute.xlu0 %1064
      %1066 = vrot.lane.b32.xlu0 %v1055, 90
      %v1067 = vpop.permute.xlu0 %1066
      %v1068 = vsel %vm452, %v1061, %v1063
      %v1069 = vsel %vm452, %v1063, %v1065
      %v1070 = vsel %vm452, %v1065, %v1067
      %v1074 = vadd.f32 %v1045, %v1068
      %v1075 = vadd.f32 %v1046, %v1069
      %v1076 = vadd.f32 %v1047, %v1070
      %s1077 = scalar_lea.vmem %s2, 16
      %v1078 = vld [vmem:[%s1077] sm:$0xff]
      %1080 = vset.pattern.permute.xlu0 0
      %1081 = vperm.xlu0 %1080, %v1078
      %v1082 = vpop.permute.xlu0 %1081
      %v1084 = vadd.f32 %v1074, %v1082
      %v1085 = vadd.f32 %v1075, %v1082
      %v1086 = vadd.f32 %v1076, %v1082
      %v1087 = vmul.f32 %v1084, 12.5
      %v1088 = vmul.f32 %v1085, 12.5
      %v1089 = vmul.f32 %v1086, 12.5
      %v1090 = vround.ne.pseudo %v1087
      %v1091 = vround.ne.pseudo %v1088
      %v1092 = vround.ne.pseudo %v1089
      %v1093 = vmul.f32 %v1090, 0.08
      %v1094 = vmul.f32 %v1091, 0.08
      %v1095 = vmul.f32 %v1092, 0.08
      %v1096 = vadd.f32 %v788, %v1093
      %v1097 = vadd.f32 %v789, %v1094
      %v1098 = vadd.f32 %v790, %v1095
      %s1099 = scalar_lea.vmem %s165, 3
      %v1100 = vld [vmem:[%s1099] ss:$4 sm:$0x7]
      %s1101 = scalar_lea.vmem %s1, 24
      %v1102 = vld [vmem:[%s1101] sm:$0xff]
      %1104 = vset.pattern.permute.xlu0 0
      %1105 = vperm.xlu0 %1104, %v1102
      %v1106 = vpop.permute.xlu0 %1105
      %v1109 = vlaneseq
      %v1110 = vshrl.u32 %v1109, 7
      %v1111 = vsub.s32 0, %v1110
      %v1112 = vrot.slane %v1100, %v1111
      %v1113 = vlaneseq
      %v1114 = vshrl.u32 %v1113, 7
      %v1115 = vsub.s32 1, %v1114
      %v1116 = vrot.slane %v1100, %v1115
      %v1117 = vlaneseq
      %v1118 = vshrl.u32 %v1117, 7
      %v1119 = vsub.s32 2, %v1118
      %v1120 = vrot.slane %v1100, %v1119
      %v1124 = vmul.f32 %v1106, %v1112
      %v1125 = vmul.f32 %v1106, %v1116
      %v1126 = vmul.f32 %v1106, %v1120
      %v1127 = vadd.f32 %v1124, 0.0
      %v1128 = vadd.f32 %v1125, 0.0
      %v1129 = vadd.f32 %v1126, 0.0
      %s1130 = scalar_lea.vmem %s165, 3
      %v1131 = vld [vmem:[%s1130] ss:$4 sm:$0xf]
      %1132 = vset.pattern.permute.xlu0 1
      %1133 = vperm.xlu0 %1132, %v1102
      %v1134 = vpop.permute.xlu0 %1133
      %v1137 = vlaneseq
      %v1138 = vshrl.u32 %v1137, 7
      %v1139 = vsub.s32 0, %v1138
      %v1140 = vrot.slane %v1131, %v1139
      %v1141 = vlaneseq
      %v1142 = vshrl.u32 %v1141, 7
      %v1143 = vsub.s32 1, %v1142
      %v1144 = vrot.slane %v1131, %v1143
      %v1145 = vlaneseq
      %v1146 = vshrl.u32 %v1145, 7
      %v1147 = vsub.s32 2, %v1146
      %v1148 = vrot.slane %v1131, %v1147
      %v1149 = vlaneseq
      %v1150 = vshrl.u32 %v1149, 7
      %v1151 = vsub.s32 3, %v1150
      %v1152 = vrot.slane %v1131, %v1151
      %v1157 = vmul.f32 %v1134, %v1140
      %v1158 = vmul.f32 %v1134, %v1144
      %v1159 = vmul.f32 %v1134, %v1148
      %v1160 = vmul.f32 %v1134, %v1152
      %1165 = vrot.lane.b32.xlu0 %v1157, 127
      %v1166 = vpop.permute.xlu0 %1165
      %1167 = vrot.lane.b32.xlu0 %v1158, 127
      %v1168 = vpop.permute.xlu0 %1167
      %1169 = vrot.lane.b32.xlu0 %v1159, 127
      %v1170 = vpop.permute.xlu0 %1169
      %1171 = vrot.lane.b32.xlu0 %v1160, 127
      %v1172 = vpop.permute.xlu0 %1171
      %v1173 = vsel %vm242, %v1166, %v1168
      %v1174 = vsel %vm242, %v1168, %v1170
      %v1175 = vsel %vm242, %v1170, %v1172
      %v1179 = vadd.f32 %v1127, %v1173
      %v1180 = vadd.f32 %v1128, %v1174
      %v1181 = vadd.f32 %v1129, %v1175
      %1182 = vset.pattern.permute.xlu0 2
      %1183 = vperm.xlu0 %1182, %v1102
      %v1184 = vpop.permute.xlu0 %1183
      %v1186 = vmul.f32 %v1184, %v1140
      %v1187 = vmul.f32 %v1184, %v1144
      %v1188 = vmul.f32 %v1184, %v1148
      %v1189 = vmul.f32 %v1184, %v1152
      %1194 = vrot.lane.b32.xlu0 %v1186, 126
      %v1195 = vpop.permute.xlu0 %1194
      %1196 = vrot.lane.b32.xlu0 %v1187, 126
      %v1197 = vpop.permute.xlu0 %1196
      %1198 = vrot.lane.b32.xlu0 %v1188, 126
      %v1199 = vpop.permute.xlu0 %1198
      %1200 = vrot.lane.b32.xlu0 %v1189, 126
      %v1201 = vpop.permute.xlu0 %1200
      %v1202 = vsel %vm272, %v1195, %v1197
      %v1203 = vsel %vm272, %v1197, %v1199
      %v1204 = vsel %vm272, %v1199, %v1201
      %v1208 = vadd.f32 %v1179, %v1202
      %v1209 = vadd.f32 %v1180, %v1203
      %v1210 = vadd.f32 %v1181, %v1204
      %1211 = vset.pattern.permute.xlu0 3
      %1212 = vperm.xlu0 %1211, %v1102
      %v1213 = vpop.permute.xlu0 %1212
      %v1215 = vmul.f32 %v1213, %v1140
      %v1216 = vmul.f32 %v1213, %v1144
      %v1217 = vmul.f32 %v1213, %v1148
      %v1218 = vmul.f32 %v1213, %v1152
      %1223 = vrot.lane.b32.xlu0 %v1215, 110
      %v1224 = vpop.permute.xlu0 %1223
      %1225 = vrot.lane.b32.xlu0 %v1216, 110
      %v1226 = vpop.permute.xlu0 %1225
      %1227 = vrot.lane.b32.xlu0 %v1217, 110
      %v1228 = vpop.permute.xlu0 %1227
      %1229 = vrot.lane.b32.xlu0 %v1218, 110
      %v1230 = vpop.permute.xlu0 %1229
      %v1231 = vsel %vm302, %v1224, %v1226
      %v1232 = vsel %vm302, %v1226, %v1228
      %v1233 = vsel %vm302, %v1228, %v1230
      %v1237 = vadd.f32 %v1208, %v1231
      %v1238 = vadd.f32 %v1209, %v1232
      %v1239 = vadd.f32 %v1210, %v1233
      %1240 = vset.pattern.permute.xlu0 4
      %1241 = vperm.xlu0 %1240, %v1102
      %v1242 = vpop.permute.xlu0 %1241
      %v1244 = vmul.f32 %v1242, %v1140
      %v1245 = vmul.f32 %v1242, %v1144
      %v1246 = vmul.f32 %v1242, %v1148
      %v1247 = vmul.f32 %v1242, %v1152
      %1252 = vrot.lane.b32.xlu0 %v1244, 109
      %v1253 = vpop.permute.xlu0 %1252
      %1254 = vrot.lane.b32.xlu0 %v1245, 109
      %v1255 = vpop.permute.xlu0 %1254
      %1256 = vrot.lane.b32.xlu0 %v1246, 109
      %v1257 = vpop.permute.xlu0 %1256
      %1258 = vrot.lane.b32.xlu0 %v1247, 109
      %v1259 = vpop.permute.xlu0 %1258
      %v1260 = vsel %vm332, %v1253, %v1255
      %v1261 = vsel %vm332, %v1255, %v1257
      %v1262 = vsel %vm332, %v1257, %v1259
      %v1266 = vadd.f32 %v1237, %v1260
      %v1267 = vadd.f32 %v1238, %v1261
      %v1268 = vadd.f32 %v1239, %v1262
      %1269 = vset.pattern.permute.xlu0 5
      %1270 = vperm.xlu0 %1269, %v1102
      %v1271 = vpop.permute.xlu0 %1270
      %v1273 = vmul.f32 %v1271, %v1140
      %v1274 = vmul.f32 %v1271, %v1144
      %v1275 = vmul.f32 %v1271, %v1148
      %v1276 = vmul.f32 %v1271, %v1152
      %1281 = vrot.lane.b32.xlu0 %v1273, 108
      %v1282 = vpop.permute.xlu0 %1281
      %1283 = vrot.lane.b32.xlu0 %v1274, 108
      %v1284 = vpop.permute.xlu0 %1283
      %1285 = vrot.lane.b32.xlu0 %v1275, 108
      %v1286 = vpop.permute.xlu0 %1285
      %1287 = vrot.lane.b32.xlu0 %v1276, 108
      %v1288 = vpop.permute.xlu0 %1287
      %v1289 = vsel %vm362, %v1282, %v1284
      %v1290 = vsel %vm362, %v1284, %v1286
      %v1291 = vsel %vm362, %v1286, %v1288
      %v1295 = vadd.f32 %v1266, %v1289
      %v1296 = vadd.f32 %v1267, %v1290
      %v1297 = vadd.f32 %v1268, %v1291
      %1298 = vset.pattern.permute.xlu0 6
      %1299 = vperm.xlu0 %1298, %v1102
      %v1300 = vpop.permute.xlu0 %1299
      %v1302 = vmul.f32 %v1300, %v1140
      %v1303 = vmul.f32 %v1300, %v1144
      %v1304 = vmul.f32 %v1300, %v1148
      %v1305 = vmul.f32 %v1300, %v1152
      %1310 = vrot.lane.b32.xlu0 %v1302, 92
      %v1311 = vpop.permute.xlu0 %1310
      %1312 = vrot.lane.b32.xlu0 %v1303, 92
      %v1313 = vpop.permute.xlu0 %1312
      %1314 = vrot.lane.b32.xlu0 %v1304, 92
      %v1315 = vpop.permute.xlu0 %1314
      %1316 = vrot.lane.b32.xlu0 %v1305, 92
      %v1317 = vpop.permute.xlu0 %1316
      %v1318 = vsel %vm392, %v1311, %v1313
      %v1319 = vsel %vm392, %v1313, %v1315
      %v1320 = vsel %vm392, %v1315, %v1317
      %v1324 = vadd.f32 %v1295, %v1318
      %v1325 = vadd.f32 %v1296, %v1319
      %v1326 = vadd.f32 %v1297, %v1320
      %1327 = vset.pattern.permute.xlu0 7
      %1328 = vperm.xlu0 %1327, %v1102
      %v1329 = vpop.permute.xlu0 %1328
      %v1331 = vmul.f32 %v1329, %v1140
      %v1332 = vmul.f32 %v1329, %v1144
      %v1333 = vmul.f32 %v1329, %v1148
      %v1334 = vmul.f32 %v1329, %v1152
      %1339 = vrot.lane.b32.xlu0 %v1331, 91
      %v1340 = vpop.permute.xlu0 %1339
      %1341 = vrot.lane.b32.xlu0 %v1332, 91
      %v1342 = vpop.permute.xlu0 %1341
      %1343 = vrot.lane.b32.xlu0 %v1333, 91
      %v1344 = vpop.permute.xlu0 %1343
      %1345 = vrot.lane.b32.xlu0 %v1334, 91
      %v1346 = vpop.permute.xlu0 %1345
      %v1347 = vsel %vm422, %v1340, %v1342
      %v1348 = vsel %vm422, %v1342, %v1344
      %v1349 = vsel %vm422, %v1344, %v1346
      %v1353 = vadd.f32 %v1324, %v1347
      %v1354 = vadd.f32 %v1325, %v1348
      %v1355 = vadd.f32 %v1326, %v1349
      %1356 = vset.pattern.permute.xlu0 8
      %1357 = vperm.xlu0 %1356, %v1102
      %v1358 = vpop.permute.xlu0 %1357
      %v1360 = vmul.f32 %v1358, %v1140
      %v1361 = vmul.f32 %v1358, %v1144
      %v1362 = vmul.f32 %v1358, %v1148
      %v1363 = vmul.f32 %v1358, %v1152
      %1368 = vrot.lane.b32.xlu0 %v1360, 90
      %v1369 = vpop.permute.xlu0 %1368
      %1370 = vrot.lane.b32.xlu0 %v1361, 90
      %v1371 = vpop.permute.xlu0 %1370
      %1372 = vrot.lane.b32.xlu0 %v1362, 90
      %v1373 = vpop.permute.xlu0 %1372
      %1374 = vrot.lane.b32.xlu0 %v1363, 90
      %v1375 = vpop.permute.xlu0 %1374
      %v1376 = vsel %vm452, %v1369, %v1371
      %v1377 = vsel %vm452, %v1371, %v1373
      %v1378 = vsel %vm452, %v1373, %v1375
      %v1382 = vadd.f32 %v1353, %v1376
      %v1383 = vadd.f32 %v1354, %v1377
      %v1384 = vadd.f32 %v1355, %v1378
      %s1385 = scalar_lea.vmem %s2, 24
      %v1386 = vld [vmem:[%s1385] sm:$0xff]
      %1388 = vset.pattern.permute.xlu0 0
      %1389 = vperm.xlu0 %1388, %v1386
      %v1390 = vpop.permute.xlu0 %1389
      %v1392 = vadd.f32 %v1382, %v1390
      %v1393 = vadd.f32 %v1383, %v1390
      %v1394 = vadd.f32 %v1384, %v1390
      %v1395 = vmul.f32 %v1392, 12.5
      %v1396 = vmul.f32 %v1393, 12.5
      %v1397 = vmul.f32 %v1394, 12.5
      %v1398 = vround.ne.pseudo %v1395
      %v1399 = vround.ne.pseudo %v1396
      %v1400 = vround.ne.pseudo %v1397
      %v1401 = vmul.f32 %v1398, 0.08
      %v1402 = vmul.f32 %v1399, 0.08
      %v1403 = vmul.f32 %v1400, 0.08
      %v1404 = vadd.f32 %v1096, %v1401
      %v1405 = vadd.f32 %v1097, %v1402
      %v1406 = vadd.f32 %v1098, %v1403
      %1407 = vst [vmem:[%s170] sm:$0xff] %v1404
      %1408 = vst [vmem:[%s170 + $0x8] sm:$0xff] %v1405
      %1409 = vst [vmem:[%s170 + $0x10] sm:$0xff] %v1406
      %p1410 = scmp.lt.s32.totalorder %s14, 1
      %s1411 = scalar_select %p1410, %s14, 1
      %s1412 = smul.addr %s1411, 3
      %s1413 = smul.addr %s1412, 8
      %s1414 = scalar_lea.vmem %s3, %s1413
      // Predicated region
      $region33: #{demolition_conv2d.1} parent=31 // pred_check
        %p1415 = pneg %p100
      $region34: #{demolition_conv2d.1} parent=31 // pred_check_branch
        %1417 = sbr.rel (%p1415) target = $region36
      $region35: #{demolition_conv2d.1} parent=31 // pred_region
        _
      $region36: #{demolition_conv2d.1} parent=31 // pred_fallthru
        _
    $region32: #{demolition_conv2d.1} parent=5 // pred_fallthru
      _
    %p1418 = scmp.le.s32.totalorder 2, %s9
    // Predicated region
    $region37: #{demolition_conv2d.1} parent=5 // pred_check
      %p1419 = pneg %p1418
    $region38: #{demolition_conv2d.1} parent=5 // pred_check_branch
      %1421 = sbr.rel (%p1419) target = $region40
    $region39: #{demolition_conv2d.1} parent=5 // pred_region
      %s1422 = ssub.s32 %s9, 2
      // Predicated region
      $region41: #{demolition_conv2d.1} parent=39 // pred_check
        %p1423 = pneg %p106
      $region42: #{demolition_conv2d.1} parent=39 // pred_check_branch
        %1425 = sbr.rel (%p1423) target = $region44
      $region43: #{demolition_conv2d.1} parent=39 // pred_region
        %p1426 = scmp.lt.s32.totalorder %s15, 1
        %s1427 = scalar_select %p1426, %s15, 1
        %s1428 = smul.addr %s1427, 3
        %s1429 = smul.addr %s1428, 8
        %s1430 = scalar_lea.vmem %s3, %s1429
      $region44: #{demolition_conv2d.1} parent=39 // pred_fallthru
        _
    $region40: #{demolition_conv2d.1} parent=5 // pred_fallthru
      _
  $region6: #{demolition_conv2d.1} parent=0 // loop_footer
    %s13 = sadd.s32 1, %s9
  $region7: #{demolition_conv2d.1} parent=0 // loop_footer_branch
    %8 = sbr.rel target = $region3
  $region8: #{demolition_conv2d.1} parent=0 // loop_exit
    _

</llo_original>
